<compile_context>
chip_gen: v7x
topology: tpu7x:2x2x1
jax: 0.10.0
libtpu: 0.0.40
codegen_flags: <defaults>
</compile_context>

<pallas_src>
import numpy as np
import jax
import jax.numpy as jnp
from jax.experimental import pallas as pl
from jax.experimental.pallas import tpu as pltpu


def swlstm_kernel(x_ref, phalf_ref, ei_ref, ej_ref, wih1_ref, wih2_ref,
                  whh_ref, b_ref, out_ref):
    """Single-program kernel: whole problem resident in VMEM.

    x_ref     : (L*B, C)    time-major flattened path (row l*B + b = x[l, b])
    phalf_ref : (T*B, T*B)  prefix matrix: strict lower triangular (per batch
                            lane) + 0.5 on the diagonal, so
                            phalf @ dx = S1_{t-1} + 0.5 * dx_t
    ei_ref    : (C, C*C)    expansion matrix, ei[i, k] = 1 iff k // C == i
    ej_ref    : (C, C*C)    expansion matrix, ej[j, k] = 1 iff k %  C == j
    wih1_ref  : (C,   4H)   input->gates weights for signature level-1 terms
    wih2_ref  : (C*C, 4H)   input->gates weights for signature level-2 terms
    whh_ref   : (H,   4H)   hidden->gates weights
    b_ref     : (1,   4H)   b_ih + b_hh
    out_ref   : (B, H)      pooled ("lstm") output
    """
    LB, C = x_ref.shape
    B, H = out_ref.shape
    T = LB // B - 1
    TB = T * B
    G = 4 * H
    f32 = jnp.float32

    # ---- hoisted loads ------------------------------------------------------
    phalf = phalf_ref[...]    # (TB, TB)
    ei = ei_ref[...]          # (C,  CC)
    ej = ej_ref[...]          # (C,  CC)
    wih1 = wih1_ref[...]      # (C,  4H)
    wih2 = wih2_ref[...]      # (CC, 4H)
    whh = whh_ref[...]        # (H,  4H)
    bias = b_ref[...]         # (1,  4H)

    # ---- Phase 1: vectorized signature->gate projection over all timesteps --
    # Chen's identity for the streamed depth-2 signature:
    #   S1_t = S1_{t-1} + dx_t
    #   S2_t = S2_{t-1} + (S1_{t-1} + 0.5 dx_t) (x) dx_t
    # Gates depend linearly on (S1, S2), so we project each step's *increment*
    # onto the gate space and let the recurrence accumulate:
    #   gin_t = dx_t @ W1 + flat((S1_{t-1}+0.5 dx_t) (x) dx_t) @ W2
    # All T steps are handled at once on the (T*B, C) slab; the exclusive
    # prefix sum S1_{t-1}+0.5 dx_t is a single matmul against `phalf`, and the
    # level-2 outer product is flattened without reshapes via the expansion
    # matrices: flat = (u @ Ei) * (dx @ Ej).
    xf = x_ref[...]                                    # (LB, C)
    dx = xf[B:, :] - xf[:TB, :]                        # (TB, C)  row t*B+b

    u = jnp.dot(phalf, dx, preferred_element_type=f32)       # (TB, C)
    a_exp = jnp.dot(u, ei, preferred_element_type=f32)        # (TB, CC)
    b_exp = jnp.dot(dx, ej, preferred_element_type=f32)       # (TB, CC)
    inc2 = a_exp * b_exp                                       # (TB, CC)
    gin = (jnp.dot(dx, wih1, preferred_element_type=f32)
           + jnp.dot(inc2, wih2, preferred_element_type=f32))  # (TB, 4H)

    # Sequence lengths: sig[t] == sig[t-1]  <=>  dx_t == 0 (exact under the
    # recursion above), so lengths = 1 + #{t >= 1 : dx_t != 0}.
    nz = (jnp.max(jnp.abs(dx), axis=1, keepdims=True) > 0.0)   # (TB, 1) bool
    nzi = nz.astype(jnp.int32)
    lengths = jnp.ones((B, 1), jnp.int32)
    for t in range(1, T):
        lengths = lengths + nzi[t * B:(t + 1) * B, :]

    # ---- Phase 2: LSTM recurrence (PyTorch gate order i, f, g, o) ------------
    # Only the h/c dependence remains serial: one (B,H)@(H,4H) matmul per step
    # plus the gate nonlinearities.  packed-sequence semantics are reproduced
    # by freezing (h, c) once t >= lengths[b]; the final h equals h_n per
    # (original-order) batch element.  sigmoid(z) = 0.5*tanh(z/2)+0.5 routes
    # through the EUP tanh slot; two full-vreg tanh pushes cover all 4 gates.
    h = jnp.zeros((B, H), f32)
    c = jnp.zeros((B, H), f32)
    g_acc = jnp.zeros((B, G), f32) + bias       # running sig-projection + bias
    for t in range(T):
        g_acc = g_acc + gin[t * B:(t + 1) * B, :]      # = sig[t] @ W_ih + bias
        gates = g_acc + jnp.dot(h, whh, preferred_element_type=f32)   # (B,4H)
        th = jnp.tanh(0.5 * gates)       # sigmoid building block (full vreg)
        tg = jnp.tanh(gates)             # candidate building block (full vreg)
        i_g = 0.5 * th[:, 0:H] + 0.5
        f_g = 0.5 * th[:, H:2 * H] + 0.5
        g_g = tg[:, 2 * H:3 * H]
        o_g = 0.5 * th[:, 3 * H:4 * H] + 0.5
        c_new = f_g * c + i_g * g_g
        h_new = o_g * jnp.tanh(c_new)
        valid = lengths > t                                           # (B,1)
        h = jnp.where(valid, h_new, h)
        c = jnp.where(valid, c_new, c)
    out_ref[...] = h


def make_expansion_matrices(C):
    CC = C * C
    k = np.arange(CC)
    ei = np.zeros((C, CC), np.float32)
    ej = np.zeros((C, CC), np.float32)
    ei[k // C, k] = 1.0
    ej[k % C, k] = 1.0
    return jnp.asarray(ei), jnp.asarray(ej)


def make_prefix_matrix(T, B):
    """phalf[t*B+b, u*B+b] = 1 if u < t, 0.5 if u == t, else 0 (0 across b)."""
    TB = T * B
    P = np.zeros((TB, TB), np.float32)
    for t in range(T):
        for b in range(B):
            for u in range(t):
                P[t * B + b, u * B + b] = 1.0
            P[t * B + b, t * B + b] = 0.5
    return jnp.asarray(P)


def swlstm_forward(x_blc, w_ih, w_hh, b_ih, b_hh):
    """x_blc: (B, L, C) batch-first, like the PyTorch module input."""
    B, L, C = x_blc.shape
    CC = C * C
    H = w_hh.shape[1]
    T = L - 1
    TB = T * B

    # time-major, batch fastest, flattened to 2D so the whole Phase-1 slab is
    # one sublane-contiguous operand.
    x_flat = jnp.transpose(x_blc, (1, 0, 2)).astype(jnp.float32).reshape(L * B, C)
    phalf = make_prefix_matrix(T, B)
    ei, ej = make_expansion_matrices(C)
    wih1 = jnp.transpose(w_ih[:, :C]).astype(jnp.float32)        # (C,  4H)
    wih2 = jnp.transpose(w_ih[:, C:]).astype(jnp.float32)        # (CC, 4H)
    whh_t = jnp.transpose(w_hh).astype(jnp.float32)              # (H,  4H)
    bias = (b_ih + b_hh)[None, :].astype(jnp.float32)            # (1,  4H)

    # Whole problem (few KB) resident in VMEM; single grid step.  For larger
    # batches on v7x a leading "parallel" grid axis over B would shard the
    # independent batch elements across the two TensorCores.
    grid_spec = pltpu.PrefetchScalarGridSpec(
        num_scalar_prefetch=0,
        grid=(1,),
        in_specs=[
            pl.BlockSpec((L * B, C), lambda i: (0, 0)),
            pl.BlockSpec((TB, TB), lambda i: (0, 0)),
            pl.BlockSpec((C, CC), lambda i: (0, 0)),
            pl.BlockSpec((C, CC), lambda i: (0, 0)),
            pl.BlockSpec((C, 4 * H), lambda i: (0, 0)),
            pl.BlockSpec((CC, 4 * H), lambda i: (0, 0)),
            pl.BlockSpec((H, 4 * H), lambda i: (0, 0)),
            pl.BlockSpec((1, 4 * H), lambda i: (0, 0)),
        ],
        out_specs=pl.BlockSpec((B, H), lambda i: (0, 0)),
        scratch_shapes=[],
    )

    return pl.pallas_call(
        swlstm_kernel,
        out_shape=jax.ShapeDtypeStruct((B, H), jnp.float32),
        grid_spec=grid_spec,
        compiler_params=pltpu.CompilerParams(
            dimension_semantics=("arbitrary",)),
    )(x_flat, phalf, ei, ej, wih1, wih2, whh_t, bias)


def reference_swlstm(x, w_ih, w_hh, b_ih, b_hh, H):
    """Pure-JAX reference of the same forward pass (for validation)."""
    B, L, C = x.shape
    s1 = jnp.zeros((B, C), jnp.float32)
    s2 = jnp.zeros((B, C, C), jnp.float32)
    sigs = []
    for t in range(1, L):
        dx = x[:, t] - x[:, t - 1]
        s2 = s2 + s1[:, :, None] * dx[:, None, :] \
                + 0.5 * dx[:, :, None] * dx[:, None, :]
        s1 = s1 + dx
        sigs.append(jnp.concatenate([s1, s2.reshape(B, -1)], axis=-1))
    sig = jnp.stack(sigs, axis=1)                                  # (B, T, SC)

    eq = jnp.all(sig[:, 1:] == sig[:, :-1], axis=-1)
    lengths = 1 + jnp.sum(jnp.logical_not(eq), axis=1)             # (B,)

    h = jnp.zeros((B, H), jnp.float32)
    c = jnp.zeros((B, H), jnp.float32)
    for t in range(sig.shape[1]):
        xt = sig[:, t]
        gates = xt @ w_ih.T + h @ w_hh.T + b_ih + b_hh
        i_g = jax.nn.sigmoid(gates[:, :H])
        f_g = jax.nn.sigmoid(gates[:, H:2 * H])
        g_g = jnp.tanh(gates[:, 2 * H:3 * H])
        o_g = jax.nn.sigmoid(gates[:, 3 * H:4 * H])
        c_new = f_g * c + i_g * g_g
        h_new = o_g * jnp.tanh(c_new)
        valid = (t < lengths)[:, None]
        h = jnp.where(valid, h_new, h)
        c = jnp.where(valid, c_new, c)
    return h


if __name__ == "__main__":
    B, L, C, H = 2, 8, 4, 32
    SC = C + C * C  # 20 signature channels at depth 2

    key = jax.random.PRNGKey(0)
    kx, k1, k2, k3, k4 = jax.random.split(key, 5)

    x = jax.random.normal(kx, (B, L, C), jnp.float32)
    # Emulate "padding applied from below": repeat the last observed row of
    # batch element 1, so its streamed signatures repeat -> shorter seq length.
    x = x.at[1, 6:, :].set(x[1, 5, :])

    bound = 1.0 / np.sqrt(H)
    w_ih = jax.random.uniform(k1, (4 * H, SC), jnp.float32, -bound, bound)
    w_hh = jax.random.uniform(k2, (4 * H, H), jnp.float32, -bound, bound)
    b_ih = jax.random.uniform(k3, (4 * H,), jnp.float32, -bound, bound)
    b_hh = jax.random.uniform(k4, (4 * H,), jnp.float32, -bound, bound)

    out = swlstm_forward(x, w_ih, w_hh, b_ih, b_hh)
    out = jax.block_until_ready(out)

    ref = reference_swlstm(x, w_ih, w_hh, b_ih, b_hh, H)
    ref = jax.block_until_ready(ref)

    assert out.shape == (B, H), out.shape
    assert np.all(np.isfinite(np.asarray(out)))
    assert np.allclose(np.asarray(out), np.asarray(ref), rtol=5e-2, atol=5e-2), (
        float(np.max(np.abs(np.asarray(out) - np.asarray(ref)))))
    print("KERNEL_OK")
</pallas_src>

<mosaic_0001>
module attributes {stable_mosaic.version = 11 : i64} {
  func.func @swlstm_kernel(%arg0: i32, %arg1: memref<16x4xf32, #tpu.memory_space<vmem>>, %arg2: memref<14x14xf32, #tpu.memory_space<vmem>>, %arg3: memref<4x16xf32, #tpu.memory_space<vmem>>, %arg4: memref<4x16xf32, #tpu.memory_space<vmem>>, %arg5: memref<4x128xf32, #tpu.memory_space<vmem>>, %arg6: memref<16x128xf32, #tpu.memory_space<vmem>>, %arg7: memref<32x128xf32, #tpu.memory_space<vmem>>, %arg8: memref<1x128xf32, #tpu.memory_space<vmem>>, %arg9: memref<2x32xf32, #tpu.memory_space<vmem>>) attributes {dimension_semantics = [#tpu.dimension_semantics<arbitrary>], iteration_bounds = array<i64: 1>, scalar_prefetch = 0 : i64, scratch_operands = 0 : i64, tpu.core_type = #tpu.core_type<tc>, window_params = [{pipeline_mode = #tpu.pipeline_mode<synchronous>, transform_indices = @transform_0, window_bounds = array<i64: 16, 4>}, {pipeline_mode = #tpu.pipeline_mode<synchronous>, transform_indices = @transform_1, window_bounds = array<i64: 14, 14>}, {pipeline_mode = #tpu.pipeline_mode<synchronous>, transform_indices = @transform_2, window_bounds = array<i64: 4, 16>}, {pipeline_mode = #tpu.pipeline_mode<synchronous>, transform_indices = @transform_3, window_bounds = array<i64: 4, 16>}, {pipeline_mode = #tpu.pipeline_mode<synchronous>, transform_indices = @transform_4, window_bounds = array<i64: 4, 128>}, {pipeline_mode = #tpu.pipeline_mode<synchronous>, transform_indices = @transform_5, window_bounds = array<i64: 16, 128>}, {pipeline_mode = #tpu.pipeline_mode<synchronous>, transform_indices = @transform_6, window_bounds = array<i64: 32, 128>}, {pipeline_mode = #tpu.pipeline_mode<synchronous>, transform_indices = @transform_7, window_bounds = array<i64: 1, 128>}, {pipeline_mode = #tpu.pipeline_mode<synchronous>, transform_indices = @transform_8, window_bounds = array<i64: 2, 32>}]} {
    %c0 = arith.constant 0 : index
    %c0_0 = arith.constant 0 : index
    %0 = vector.load %arg2[%c0, %c0_0] : memref<14x14xf32, #tpu.memory_space<vmem>>, vector<14x14xf32>
    %c0_1 = arith.constant 0 : index
    %c0_2 = arith.constant 0 : index
    %1 = vector.load %arg3[%c0_1, %c0_2] : memref<4x16xf32, #tpu.memory_space<vmem>>, vector<4x16xf32>
    %c0_3 = arith.constant 0 : index
    %c0_4 = arith.constant 0 : index
    %2 = vector.load %arg4[%c0_3, %c0_4] : memref<4x16xf32, #tpu.memory_space<vmem>>, vector<4x16xf32>
    %c0_5 = arith.constant 0 : index
    %c0_6 = arith.constant 0 : index
    %3 = vector.load %arg5[%c0_5, %c0_6] : memref<4x128xf32, #tpu.memory_space<vmem>>, vector<4x128xf32>
    %c0_7 = arith.constant 0 : index
    %c0_8 = arith.constant 0 : index
    %4 = vector.load %arg6[%c0_7, %c0_8] : memref<16x128xf32, #tpu.memory_space<vmem>>, vector<16x128xf32>
    %c0_9 = arith.constant 0 : index
    %c0_10 = arith.constant 0 : index
    %5 = vector.load %arg7[%c0_9, %c0_10] : memref<32x128xf32, #tpu.memory_space<vmem>>, vector<32x128xf32>
    %c0_11 = arith.constant 0 : index
    %c0_12 = arith.constant 0 : index
    %6 = vector.load %arg8[%c0_11, %c0_12] : memref<1x128xf32, #tpu.memory_space<vmem>>, vector<1x128xf32>
    %c0_13 = arith.constant 0 : index
    %c0_14 = arith.constant 0 : index
    %7 = vector.load %arg1[%c0_13, %c0_14] : memref<16x4xf32, #tpu.memory_space<vmem>>, vector<16x4xf32>
    %8 = vector.extract_strided_slice %7 {offsets = [2, 0], sizes = [14, 4], strides = [1, 1]} : vector<16x4xf32> to vector<14x4xf32>
    %9 = vector.extract_strided_slice %7 {offsets = [0, 0], sizes = [14, 4], strides = [1, 1]} : vector<16x4xf32> to vector<14x4xf32>
    %10 = arith.subf %8, %9 : vector<14x4xf32>
    %cst = arith.constant dense<0.000000e+00> : vector<14x4xf32>
    %11 = tpu.matmul %0, %10, %cst {dimension_numbers = #tpu.dot_dimension_numbers<[1], [0], [0], [1], [0, 0, 1, 1], [], []>} : vector<14x14xf32>, vector<14x4xf32>, vector<14x4xf32> -> vector<14x4xf32>
    %cst_15 = arith.constant dense<0.000000e+00> : vector<14x16xf32>
    %12 = tpu.matmul %11, %1, %cst_15 {dimension_numbers = #tpu.dot_dimension_numbers<[1], [0], [0], [1], [0, 0, 1, 1], [], []>} : vector<14x4xf32>, vector<4x16xf32>, vector<14x16xf32> -> vector<14x16xf32>
    %cst_16 = arith.constant dense<0.000000e+00> : vector<14x16xf32>
    %13 = tpu.matmul %10, %2, %cst_16 {dimension_numbers = #tpu.dot_dimension_numbers<[1], [0], [0], [1], [0, 0, 1, 1], [], []>} : vector<14x4xf32>, vector<4x16xf32>, vector<14x16xf32> -> vector<14x16xf32>
    %14 = arith.mulf %12, %13 : vector<14x16xf32>
    %cst_17 = arith.constant dense<0.000000e+00> : vector<14x128xf32>
    %15 = tpu.matmul %10, %3, %cst_17 {dimension_numbers = #tpu.dot_dimension_numbers<[1], [0], [0], [1], [0, 0, 1, 1], [], []>} : vector<14x4xf32>, vector<4x128xf32>, vector<14x128xf32> -> vector<14x128xf32>
    %cst_18 = arith.constant dense<0.000000e+00> : vector<14x128xf32>
    %16 = tpu.matmul %14, %4, %cst_18 {dimension_numbers = #tpu.dot_dimension_numbers<[1], [0], [0], [1], [0, 0, 1, 1], [], []>} : vector<14x16xf32>, vector<16x128xf32>, vector<14x128xf32> -> vector<14x128xf32>
    %17 = arith.addf %15, %16 : vector<14x128xf32>
    %18 = math.absf %10 : vector<14x4xf32>
    %cst_19 = arith.constant dense<0xFF800000> : vector<14xf32>
    %19 = vector.multi_reduction <maximumf>, %18, %cst_19 [1] : vector<14x4xf32> to vector<14xf32>
    %20 = vector.shape_cast %19 : vector<14xf32> to vector<14x1xf32>
    %cst_20 = arith.constant 0.000000e+00 : f32
    %21 = vector.broadcast %cst_20 : f32 to vector<14x1xf32>
    %22 = arith.cmpf ogt, %20, %21 : vector<14x1xf32>
    %23 = arith.extui %22 : vector<14x1xi1> to vector<14x1xi32>
    %c1_i32 = arith.constant 1 : i32
    %24 = vector.broadcast %c1_i32 : i32 to vector<2x1xi32>
    %25 = vector.extract_strided_slice %23 {offsets = [2, 0], sizes = [2, 1], strides = [1, 1]} : vector<14x1xi32> to vector<2x1xi32>
    %26 = arith.addi %24, %25 : vector<2x1xi32>
    %27 = vector.extract_strided_slice %23 {offsets = [4, 0], sizes = [2, 1], strides = [1, 1]} : vector<14x1xi32> to vector<2x1xi32>
    %28 = arith.addi %26, %27 : vector<2x1xi32>
    %29 = vector.extract_strided_slice %23 {offsets = [6, 0], sizes = [2, 1], strides = [1, 1]} : vector<14x1xi32> to vector<2x1xi32>
    %30 = arith.addi %28, %29 : vector<2x1xi32>
    %31 = vector.extract_strided_slice %23 {offsets = [8, 0], sizes = [2, 1], strides = [1, 1]} : vector<14x1xi32> to vector<2x1xi32>
    %32 = arith.addi %30, %31 : vector<2x1xi32>
    %33 = vector.extract_strided_slice %23 {offsets = [10, 0], sizes = [2, 1], strides = [1, 1]} : vector<14x1xi32> to vector<2x1xi32>
    %34 = arith.addi %32, %33 : vector<2x1xi32>
    %35 = vector.extract_strided_slice %23 {offsets = [12, 0], sizes = [2, 1], strides = [1, 1]} : vector<14x1xi32> to vector<2x1xi32>
    %36 = arith.addi %34, %35 : vector<2x1xi32>
    %cst_21 = arith.constant 0.000000e+00 : f32
    %37 = vector.broadcast %cst_21 : f32 to vector<2x32xf32>
    %cst_22 = arith.constant 0.000000e+00 : f32
    %38 = vector.broadcast %cst_22 : f32 to vector<2x32xf32>
    %cst_23 = arith.constant 0.000000e+00 : f32
    %39 = vector.broadcast %cst_23 : f32 to vector<2x128xf32>
    %40 = vector.broadcast %6 : vector<1x128xf32> to vector<2x128xf32>
    %41 = arith.addf %39, %40 : vector<2x128xf32>
    %42 = vector.extract_strided_slice %17 {offsets = [0, 0], sizes = [2, 128], strides = [1, 1]} : vector<14x128xf32> to vector<2x128xf32>
    %43 = arith.addf %41, %42 : vector<2x128xf32>
    %cst_24 = arith.constant dense<0.000000e+00> : vector<2x128xf32>
    %44 = tpu.matmul %37, %5, %cst_24 {dimension_numbers = #tpu.dot_dimension_numbers<[1], [0], [0], [1], [0, 0, 1, 1], [], []>} : vector<2x32xf32>, vector<32x128xf32>, vector<2x128xf32> -> vector<2x128xf32>
    %45 = arith.addf %43, %44 : vector<2x128xf32>
    %cst_25 = arith.constant 5.000000e-01 : f32
    %46 = vector.broadcast %cst_25 : f32 to vector<2x128xf32>
    %47 = arith.mulf %46, %45 : vector<2x128xf32>
    %48 = math.tanh %47 : vector<2x128xf32>
    %49 = math.tanh %45 : vector<2x128xf32>
    %50 = vector.extract_strided_slice %48 {offsets = [0, 0], sizes = [2, 32], strides = [1, 1]} : vector<2x128xf32> to vector<2x32xf32>
    %cst_26 = arith.constant 5.000000e-01 : f32
    %51 = vector.broadcast %cst_26 : f32 to vector<2x32xf32>
    %52 = arith.mulf %51, %50 : vector<2x32xf32>
    %cst_27 = arith.constant 5.000000e-01 : f32
    %53 = vector.broadcast %cst_27 : f32 to vector<2x32xf32>
    %54 = arith.addf %52, %53 : vector<2x32xf32>
    %55 = vector.extract_strided_slice %48 {offsets = [0, 32], sizes = [2, 32], strides = [1, 1]} : vector<2x128xf32> to vector<2x32xf32>
    %cst_28 = arith.constant 5.000000e-01 : f32
    %56 = vector.broadcast %cst_28 : f32 to vector<2x32xf32>
    %57 = arith.mulf %56, %55 : vector<2x32xf32>
    %cst_29 = arith.constant 5.000000e-01 : f32
    %58 = vector.broadcast %cst_29 : f32 to vector<2x32xf32>
    %59 = arith.addf %57, %58 : vector<2x32xf32>
    %60 = vector.extract_strided_slice %49 {offsets = [0, 64], sizes = [2, 32], strides = [1, 1]} : vector<2x128xf32> to vector<2x32xf32>
    %61 = vector.extract_strided_slice %48 {offsets = [0, 96], sizes = [2, 32], strides = [1, 1]} : vector<2x128xf32> to vector<2x32xf32>
    %cst_30 = arith.constant 5.000000e-01 : f32
    %62 = vector.broadcast %cst_30 : f32 to vector<2x32xf32>
    %63 = arith.mulf %62, %61 : vector<2x32xf32>
    %cst_31 = arith.constant 5.000000e-01 : f32
    %64 = vector.broadcast %cst_31 : f32 to vector<2x32xf32>
    %65 = arith.addf %63, %64 : vector<2x32xf32>
    %66 = arith.mulf %59, %38 : vector<2x32xf32>
    %67 = arith.mulf %54, %60 : vector<2x32xf32>
    %68 = arith.addf %66, %67 : vector<2x32xf32>
    %69 = math.tanh %68 : vector<2x32xf32>
    %70 = arith.mulf %65, %69 : vector<2x32xf32>
    %c0_i32 = arith.constant 0 : i32
    %71 = vector.broadcast %c0_i32 : i32 to vector<2x1xi32>
    %72 = arith.cmpi sgt, %36, %71 : vector<2x1xi32>
    %73 = vector.shape_cast %72 : vector<2x1xi1> to vector<2x1xi1>
    %74 = vector.broadcast %73 : vector<2x1xi1> to vector<2x32xi1>
    %75 = arith.select %74, %70, %37 : vector<2x32xi1>, vector<2x32xf32>
    %76 = vector.shape_cast %72 : vector<2x1xi1> to vector<2x1xi1>
    %77 = vector.broadcast %76 : vector<2x1xi1> to vector<2x32xi1>
    %78 = arith.select %77, %68, %38 : vector<2x32xi1>, vector<2x32xf32>
    %79 = vector.extract_strided_slice %17 {offsets = [2, 0], sizes = [2, 128], strides = [1, 1]} : vector<14x128xf32> to vector<2x128xf32>
    %80 = arith.addf %43, %79 : vector<2x128xf32>
    %cst_32 = arith.constant dense<0.000000e+00> : vector<2x128xf32>
    %81 = tpu.matmul %75, %5, %cst_32 {dimension_numbers = #tpu.dot_dimension_numbers<[1], [0], [0], [1], [0, 0, 1, 1], [], []>} : vector<2x32xf32>, vector<32x128xf32>, vector<2x128xf32> -> vector<2x128xf32>
    %82 = arith.addf %80, %81 : vector<2x128xf32>
    %cst_33 = arith.constant 5.000000e-01 : f32
    %83 = vector.broadcast %cst_33 : f32 to vector<2x128xf32>
    %84 = arith.mulf %83, %82 : vector<2x128xf32>
    %85 = math.tanh %84 : vector<2x128xf32>
    %86 = math.tanh %82 : vector<2x128xf32>
    %87 = vector.extract_strided_slice %85 {offsets = [0, 0], sizes = [2, 32], strides = [1, 1]} : vector<2x128xf32> to vector<2x32xf32>
    %cst_34 = arith.constant 5.000000e-01 : f32
    %88 = vector.broadcast %cst_34 : f32 to vector<2x32xf32>
    %89 = arith.mulf %88, %87 : vector<2x32xf32>
    %cst_35 = arith.constant 5.000000e-01 : f32
    %90 = vector.broadcast %cst_35 : f32 to vector<2x32xf32>
    %91 = arith.addf %89, %90 : vector<2x32xf32>
    %92 = vector.extract_strided_slice %85 {offsets = [0, 32], sizes = [2, 32], strides = [1, 1]} : vector<2x128xf32> to vector<2x32xf32>
    %cst_36 = arith.constant 5.000000e-01 : f32
    %93 = vector.broadcast %cst_36 : f32 to vector<2x32xf32>
    %94 = arith.mulf %93, %92 : vector<2x32xf32>
    %cst_37 = arith.constant 5.000000e-01 : f32
    %95 = vector.broadcast %cst_37 : f32 to vector<2x32xf32>
    %96 = arith.addf %94, %95 : vector<2x32xf32>
    %97 = vector.extract_strided_slice %86 {offsets = [0, 64], sizes = [2, 32], strides = [1, 1]} : vector<2x128xf32> to vector<2x32xf32>
    %98 = vector.extract_strided_slice %85 {offsets = [0, 96], sizes = [2, 32], strides = [1, 1]} : vector<2x128xf32> to vector<2x32xf32>
    %cst_38 = arith.constant 5.000000e-01 : f32
    %99 = vector.broadcast %cst_38 : f32 to vector<2x32xf32>
    %100 = arith.mulf %99, %98 : vector<2x32xf32>
    %cst_39 = arith.constant 5.000000e-01 : f32
    %101 = vector.broadcast %cst_39 : f32 to vector<2x32xf32>
    %102 = arith.addf %100, %101 : vector<2x32xf32>
    %103 = arith.mulf %96, %78 : vector<2x32xf32>
    %104 = arith.mulf %91, %97 : vector<2x32xf32>
    %105 = arith.addf %103, %104 : vector<2x32xf32>
    %106 = math.tanh %105 : vector<2x32xf32>
    %107 = arith.mulf %102, %106 : vector<2x32xf32>
    %c1_i32_40 = arith.constant 1 : i32
    %108 = vector.broadcast %c1_i32_40 : i32 to vector<2x1xi32>
    %109 = arith.cmpi sgt, %36, %108 : vector<2x1xi32>
    %110 = vector.shape_cast %109 : vector<2x1xi1> to vector<2x1xi1>
    %111 = vector.broadcast %110 : vector<2x1xi1> to vector<2x32xi1>
    %112 = arith.select %111, %107, %75 : vector<2x32xi1>, vector<2x32xf32>
    %113 = vector.shape_cast %109 : vector<2x1xi1> to vector<2x1xi1>
    %114 = vector.broadcast %113 : vector<2x1xi1> to vector<2x32xi1>
    %115 = arith.select %114, %105, %78 : vector<2x32xi1>, vector<2x32xf32>
    %116 = vector.extract_strided_slice %17 {offsets = [4, 0], sizes = [2, 128], strides = [1, 1]} : vector<14x128xf32> to vector<2x128xf32>
    %117 = arith.addf %80, %116 : vector<2x128xf32>
    %cst_41 = arith.constant dense<0.000000e+00> : vector<2x128xf32>
    %118 = tpu.matmul %112, %5, %cst_41 {dimension_numbers = #tpu.dot_dimension_numbers<[1], [0], [0], [1], [0, 0, 1, 1], [], []>} : vector<2x32xf32>, vector<32x128xf32>, vector<2x128xf32> -> vector<2x128xf32>
    %119 = arith.addf %117, %118 : vector<2x128xf32>
    %cst_42 = arith.constant 5.000000e-01 : f32
    %120 = vector.broadcast %cst_42 : f32 to vector<2x128xf32>
    %121 = arith.mulf %120, %119 : vector<2x128xf32>
    %122 = math.tanh %121 : vector<2x128xf32>
    %123 = math.tanh %119 : vector<2x128xf32>
    %124 = vector.extract_strided_slice %122 {offsets = [0, 0], sizes = [2, 32], strides = [1, 1]} : vector<2x128xf32> to vector<2x32xf32>
    %cst_43 = arith.constant 5.000000e-01 : f32
    %125 = vector.broadcast %cst_43 : f32 to vector<2x32xf32>
    %126 = arith.mulf %125, %124 : vector<2x32xf32>
    %cst_44 = arith.constant 5.000000e-01 : f32
    %127 = vector.broadcast %cst_44 : f32 to vector<2x32xf32>
    %128 = arith.addf %126, %127 : vector<2x32xf32>
    %129 = vector.extract_strided_slice %122 {offsets = [0, 32], sizes = [2, 32], strides = [1, 1]} : vector<2x128xf32> to vector<2x32xf32>
    %cst_45 = arith.constant 5.000000e-01 : f32
    %130 = vector.broadcast %cst_45 : f32 to vector<2x32xf32>
    %131 = arith.mulf %130, %129 : vector<2x32xf32>
    %cst_46 = arith.constant 5.000000e-01 : f32
    %132 = vector.broadcast %cst_46 : f32 to vector<2x32xf32>
    %133 = arith.addf %131, %132 : vector<2x32xf32>
    %134 = vector.extract_strided_slice %123 {offsets = [0, 64], sizes = [2, 32], strides = [1, 1]} : vector<2x128xf32> to vector<2x32xf32>
    %135 = vector.extract_strided_slice %122 {offsets = [0, 96], sizes = [2, 32], strides = [1, 1]} : vector<2x128xf32> to vector<2x32xf32>
    %cst_47 = arith.constant 5.000000e-01 : f32
    %136 = vector.broadcast %cst_47 : f32 to vector<2x32xf32>
    %137 = arith.mulf %136, %135 : vector<2x32xf32>
    %cst_48 = arith.constant 5.000000e-01 : f32
    %138 = vector.broadcast %cst_48 : f32 to vector<2x32xf32>
    %139 = arith.addf %137, %138 : vector<2x32xf32>
    %140 = arith.mulf %133, %115 : vector<2x32xf32>
    %141 = arith.mulf %128, %134 : vector<2x32xf32>
    %142 = arith.addf %140, %141 : vector<2x32xf32>
    %143 = math.tanh %142 : vector<2x32xf32>
    %144 = arith.mulf %139, %143 : vector<2x32xf32>
    %c2_i32 = arith.constant 2 : i32
    %145 = vector.broadcast %c2_i32 : i32 to vector<2x1xi32>
    %146 = arith.cmpi sgt, %36, %145 : vector<2x1xi32>
    %147 = vector.shape_cast %146 : vector<2x1xi1> to vector<2x1xi1>
    %148 = vector.broadcast %147 : vector<2x1xi1> to vector<2x32xi1>
    %149 = arith.select %148, %144, %112 : vector<2x32xi1>, vector<2x32xf32>
    %150 = vector.shape_cast %146 : vector<2x1xi1> to vector<2x1xi1>
    %151 = vector.broadcast %150 : vector<2x1xi1> to vector<2x32xi1>
    %152 = arith.select %151, %142, %115 : vector<2x32xi1>, vector<2x32xf32>
    %153 = vector.extract_strided_slice %17 {offsets = [6, 0], sizes = [2, 128], strides = [1, 1]} : vector<14x128xf32> to vector<2x128xf32>
    %154 = arith.addf %117, %153 : vector<2x128xf32>
    %cst_49 = arith.constant dense<0.000000e+00> : vector<2x128xf32>
    %155 = tpu.matmul %149, %5, %cst_49 {dimension_numbers = #tpu.dot_dimension_numbers<[1], [0], [0], [1], [0, 0, 1, 1], [], []>} : vector<2x32xf32>, vector<32x128xf32>, vector<2x128xf32> -> vector<2x128xf32>
    %156 = arith.addf %154, %155 : vector<2x128xf32>
    %cst_50 = arith.constant 5.000000e-01 : f32
    %157 = vector.broadcast %cst_50 : f32 to vector<2x128xf32>
    %158 = arith.mulf %157, %156 : vector<2x128xf32>
    %159 = math.tanh %158 : vector<2x128xf32>
    %160 = math.tanh %156 : vector<2x128xf32>
    %161 = vector.extract_strided_slice %159 {offsets = [0, 0], sizes = [2, 32], strides = [1, 1]} : vector<2x128xf32> to vector<2x32xf32>
    %cst_51 = arith.constant 5.000000e-01 : f32
    %162 = vector.broadcast %cst_51 : f32 to vector<2x32xf32>
    %163 = arith.mulf %162, %161 : vector<2x32xf32>
    %cst_52 = arith.constant 5.000000e-01 : f32
    %164 = vector.broadcast %cst_52 : f32 to vector<2x32xf32>
    %165 = arith.addf %163, %164 : vector<2x32xf32>
    %166 = vector.extract_strided_slice %159 {offsets = [0, 32], sizes = [2, 32], strides = [1, 1]} : vector<2x128xf32> to vector<2x32xf32>
    %cst_53 = arith.constant 5.000000e-01 : f32
    %167 = vector.broadcast %cst_53 : f32 to vector<2x32xf32>
    %168 = arith.mulf %167, %166 : vector<2x32xf32>
    %cst_54 = arith.constant 5.000000e-01 : f32
    %169 = vector.broadcast %cst_54 : f32 to vector<2x32xf32>
    %170 = arith.addf %168, %169 : vector<2x32xf32>
    %171 = vector.extract_strided_slice %160 {offsets = [0, 64], sizes = [2, 32], strides = [1, 1]} : vector<2x128xf32> to vector<2x32xf32>
    %172 = vector.extract_strided_slice %159 {offsets = [0, 96], sizes = [2, 32], strides = [1, 1]} : vector<2x128xf32> to vector<2x32xf32>
    %cst_55 = arith.constant 5.000000e-01 : f32
    %173 = vector.broadcast %cst_55 : f32 to vector<2x32xf32>
    %174 = arith.mulf %173, %172 : vector<2x32xf32>
    %cst_56 = arith.constant 5.000000e-01 : f32
    %175 = vector.broadcast %cst_56 : f32 to vector<2x32xf32>
    %176 = arith.addf %174, %175 : vector<2x32xf32>
    %177 = arith.mulf %170, %152 : vector<2x32xf32>
    %178 = arith.mulf %165, %171 : vector<2x32xf32>
    %179 = arith.addf %177, %178 : vector<2x32xf32>
    %180 = math.tanh %179 : vector<2x32xf32>
    %181 = arith.mulf %176, %180 : vector<2x32xf32>
    %c3_i32 = arith.constant 3 : i32
    %182 = vector.broadcast %c3_i32 : i32 to vector<2x1xi32>
    %183 = arith.cmpi sgt, %36, %182 : vector<2x1xi32>
    %184 = vector.shape_cast %183 : vector<2x1xi1> to vector<2x1xi1>
    %185 = vector.broadcast %184 : vector<2x1xi1> to vector<2x32xi1>
    %186 = arith.select %185, %181, %149 : vector<2x32xi1>, vector<2x32xf32>
    %187 = vector.shape_cast %183 : vector<2x1xi1> to vector<2x1xi1>
    %188 = vector.broadcast %187 : vector<2x1xi1> to vector<2x32xi1>
    %189 = arith.select %188, %179, %152 : vector<2x32xi1>, vector<2x32xf32>
    %190 = vector.extract_strided_slice %17 {offsets = [8, 0], sizes = [2, 128], strides = [1, 1]} : vector<14x128xf32> to vector<2x128xf32>
    %191 = arith.addf %154, %190 : vector<2x128xf32>
    %cst_57 = arith.constant dense<0.000000e+00> : vector<2x128xf32>
    %192 = tpu.matmul %186, %5, %cst_57 {dimension_numbers = #tpu.dot_dimension_numbers<[1], [0], [0], [1], [0, 0, 1, 1], [], []>} : vector<2x32xf32>, vector<32x128xf32>, vector<2x128xf32> -> vector<2x128xf32>
    %193 = arith.addf %191, %192 : vector<2x128xf32>
    %cst_58 = arith.constant 5.000000e-01 : f32
    %194 = vector.broadcast %cst_58 : f32 to vector<2x128xf32>
    %195 = arith.mulf %194, %193 : vector<2x128xf32>
    %196 = math.tanh %195 : vector<2x128xf32>
    %197 = math.tanh %193 : vector<2x128xf32>
    %198 = vector.extract_strided_slice %196 {offsets = [0, 0], sizes = [2, 32], strides = [1, 1]} : vector<2x128xf32> to vector<2x32xf32>
    %cst_59 = arith.constant 5.000000e-01 : f32
    %199 = vector.broadcast %cst_59 : f32 to vector<2x32xf32>
    %200 = arith.mulf %199, %198 : vector<2x32xf32>
    %cst_60 = arith.constant 5.000000e-01 : f32
    %201 = vector.broadcast %cst_60 : f32 to vector<2x32xf32>
    %202 = arith.addf %200, %201 : vector<2x32xf32>
    %203 = vector.extract_strided_slice %196 {offsets = [0, 32], sizes = [2, 32], strides = [1, 1]} : vector<2x128xf32> to vector<2x32xf32>
    %cst_61 = arith.constant 5.000000e-01 : f32
    %204 = vector.broadcast %cst_61 : f32 to vector<2x32xf32>
    %205 = arith.mulf %204, %203 : vector<2x32xf32>
    %cst_62 = arith.constant 5.000000e-01 : f32
    %206 = vector.broadcast %cst_62 : f32 to vector<2x32xf32>
    %207 = arith.addf %205, %206 : vector<2x32xf32>
    %208 = vector.extract_strided_slice %197 {offsets = [0, 64], sizes = [2, 32], strides = [1, 1]} : vector<2x128xf32> to vector<2x32xf32>
    %209 = vector.extract_strided_slice %196 {offsets = [0, 96], sizes = [2, 32], strides = [1, 1]} : vector<2x128xf32> to vector<2x32xf32>
    %cst_63 = arith.constant 5.000000e-01 : f32
    %210 = vector.broadcast %cst_63 : f32 to vector<2x32xf32>
    %211 = arith.mulf %210, %209 : vector<2x32xf32>
    %cst_64 = arith.constant 5.000000e-01 : f32
    %212 = vector.broadcast %cst_64 : f32 to vector<2x32xf32>
    %213 = arith.addf %211, %212 : vector<2x32xf32>
    %214 = arith.mulf %207, %189 : vector<2x32xf32>
    %215 = arith.mulf %202, %208 : vector<2x32xf32>
    %216 = arith.addf %214, %215 : vector<2x32xf32>
    %217 = math.tanh %216 : vector<2x32xf32>
    %218 = arith.mulf %213, %217 : vector<2x32xf32>
    %c4_i32 = arith.constant 4 : i32
    %219 = vector.broadcast %c4_i32 : i32 to vector<2x1xi32>
    %220 = arith.cmpi sgt, %36, %219 : vector<2x1xi32>
    %221 = vector.shape_cast %220 : vector<2x1xi1> to vector<2x1xi1>
    %222 = vector.broadcast %221 : vector<2x1xi1> to vector<2x32xi1>
    %223 = arith.select %222, %218, %186 : vector<2x32xi1>, vector<2x32xf32>
    %224 = vector.shape_cast %220 : vector<2x1xi1> to vector<2x1xi1>
    %225 = vector.broadcast %224 : vector<2x1xi1> to vector<2x32xi1>
    %226 = arith.select %225, %216, %189 : vector<2x32xi1>, vector<2x32xf32>
    %227 = vector.extract_strided_slice %17 {offsets = [10, 0], sizes = [2, 128], strides = [1, 1]} : vector<14x128xf32> to vector<2x128xf32>
    %228 = arith.addf %191, %227 : vector<2x128xf32>
    %cst_65 = arith.constant dense<0.000000e+00> : vector<2x128xf32>
    %229 = tpu.matmul %223, %5, %cst_65 {dimension_numbers = #tpu.dot_dimension_numbers<[1], [0], [0], [1], [0, 0, 1, 1], [], []>} : vector<2x32xf32>, vector<32x128xf32>, vector<2x128xf32> -> vector<2x128xf32>
    %230 = arith.addf %228, %229 : vector<2x128xf32>
    %cst_66 = arith.constant 5.000000e-01 : f32
    %231 = vector.broadcast %cst_66 : f32 to vector<2x128xf32>
    %232 = arith.mulf %231, %230 : vector<2x128xf32>
    %233 = math.tanh %232 : vector<2x128xf32>
    %234 = math.tanh %230 : vector<2x128xf32>
    %235 = vector.extract_strided_slice %233 {offsets = [0, 0], sizes = [2, 32], strides = [1, 1]} : vector<2x128xf32> to vector<2x32xf32>
    %cst_67 = arith.constant 5.000000e-01 : f32
    %236 = vector.broadcast %cst_67 : f32 to vector<2x32xf32>
    %237 = arith.mulf %236, %235 : vector<2x32xf32>
    %cst_68 = arith.constant 5.000000e-01 : f32
    %238 = vector.broadcast %cst_68 : f32 to vector<2x32xf32>
    %239 = arith.addf %237, %238 : vector<2x32xf32>
    %240 = vector.extract_strided_slice %233 {offsets = [0, 32], sizes = [2, 32], strides = [1, 1]} : vector<2x128xf32> to vector<2x32xf32>
    %cst_69 = arith.constant 5.000000e-01 : f32
    %241 = vector.broadcast %cst_69 : f32 to vector<2x32xf32>
    %242 = arith.mulf %241, %240 : vector<2x32xf32>
    %cst_70 = arith.constant 5.000000e-01 : f32
    %243 = vector.broadcast %cst_70 : f32 to vector<2x32xf32>
    %244 = arith.addf %242, %243 : vector<2x32xf32>
    %245 = vector.extract_strided_slice %234 {offsets = [0, 64], sizes = [2, 32], strides = [1, 1]} : vector<2x128xf32> to vector<2x32xf32>
    %246 = vector.extract_strided_slice %233 {offsets = [0, 96], sizes = [2, 32], strides = [1, 1]} : vector<2x128xf32> to vector<2x32xf32>
    %cst_71 = arith.constant 5.000000e-01 : f32
    %247 = vector.broadcast %cst_71 : f32 to vector<2x32xf32>
    %248 = arith.mulf %247, %246 : vector<2x32xf32>
    %cst_72 = arith.constant 5.000000e-01 : f32
    %249 = vector.broadcast %cst_72 : f32 to vector<2x32xf32>
    %250 = arith.addf %248, %249 : vector<2x32xf32>
    %251 = arith.mulf %244, %226 : vector<2x32xf32>
    %252 = arith.mulf %239, %245 : vector<2x32xf32>
    %253 = arith.addf %251, %252 : vector<2x32xf32>
    %254 = math.tanh %253 : vector<2x32xf32>
    %255 = arith.mulf %250, %254 : vector<2x32xf32>
    %c5_i32 = arith.constant 5 : i32
    %256 = vector.broadcast %c5_i32 : i32 to vector<2x1xi32>
    %257 = arith.cmpi sgt, %36, %256 : vector<2x1xi32>
    %258 = vector.shape_cast %257 : vector<2x1xi1> to vector<2x1xi1>
    %259 = vector.broadcast %258 : vector<2x1xi1> to vector<2x32xi1>
    %260 = arith.select %259, %255, %223 : vector<2x32xi1>, vector<2x32xf32>
    %261 = vector.shape_cast %257 : vector<2x1xi1> to vector<2x1xi1>
    %262 = vector.broadcast %261 : vector<2x1xi1> to vector<2x32xi1>
    %263 = arith.select %262, %253, %226 : vector<2x32xi1>, vector<2x32xf32>
    %264 = vector.extract_strided_slice %17 {offsets = [12, 0], sizes = [2, 128], strides = [1, 1]} : vector<14x128xf32> to vector<2x128xf32>
    %265 = arith.addf %228, %264 : vector<2x128xf32>
    %cst_73 = arith.constant dense<0.000000e+00> : vector<2x128xf32>
    %266 = tpu.matmul %260, %5, %cst_73 {dimension_numbers = #tpu.dot_dimension_numbers<[1], [0], [0], [1], [0, 0, 1, 1], [], []>} : vector<2x32xf32>, vector<32x128xf32>, vector<2x128xf32> -> vector<2x128xf32>
    %267 = arith.addf %265, %266 : vector<2x128xf32>
    %cst_74 = arith.constant 5.000000e-01 : f32
    %268 = vector.broadcast %cst_74 : f32 to vector<2x128xf32>
    %269 = arith.mulf %268, %267 : vector<2x128xf32>
    %270 = math.tanh %269 : vector<2x128xf32>
    %271 = math.tanh %267 : vector<2x128xf32>
    %272 = vector.extract_strided_slice %270 {offsets = [0, 0], sizes = [2, 32], strides = [1, 1]} : vector<2x128xf32> to vector<2x32xf32>
    %cst_75 = arith.constant 5.000000e-01 : f32
    %273 = vector.broadcast %cst_75 : f32 to vector<2x32xf32>
    %274 = arith.mulf %273, %272 : vector<2x32xf32>
    %cst_76 = arith.constant 5.000000e-01 : f32
    %275 = vector.broadcast %cst_76 : f32 to vector<2x32xf32>
    %276 = arith.addf %274, %275 : vector<2x32xf32>
    %277 = vector.extract_strided_slice %270 {offsets = [0, 32], sizes = [2, 32], strides = [1, 1]} : vector<2x128xf32> to vector<2x32xf32>
    %cst_77 = arith.constant 5.000000e-01 : f32
    %278 = vector.broadcast %cst_77 : f32 to vector<2x32xf32>
    %279 = arith.mulf %278, %277 : vector<2x32xf32>
    %cst_78 = arith.constant 5.000000e-01 : f32
    %280 = vector.broadcast %cst_78 : f32 to vector<2x32xf32>
    %281 = arith.addf %279, %280 : vector<2x32xf32>
    %282 = vector.extract_strided_slice %271 {offsets = [0, 64], sizes = [2, 32], strides = [1, 1]} : vector<2x128xf32> to vector<2x32xf32>
    %283 = vector.extract_strided_slice %270 {offsets = [0, 96], sizes = [2, 32], strides = [1, 1]} : vector<2x128xf32> to vector<2x32xf32>
    %cst_79 = arith.constant 5.000000e-01 : f32
    %284 = vector.broadcast %cst_79 : f32 to vector<2x32xf32>
    %285 = arith.mulf %284, %283 : vector<2x32xf32>
    %cst_80 = arith.constant 5.000000e-01 : f32
    %286 = vector.broadcast %cst_80 : f32 to vector<2x32xf32>
    %287 = arith.addf %285, %286 : vector<2x32xf32>
    %288 = arith.mulf %281, %263 : vector<2x32xf32>
    %289 = arith.mulf %276, %282 : vector<2x32xf32>
    %290 = arith.addf %288, %289 : vector<2x32xf32>
    %291 = math.tanh %290 : vector<2x32xf32>
    %292 = arith.mulf %287, %291 : vector<2x32xf32>
    %c6_i32 = arith.constant 6 : i32
    %293 = vector.broadcast %c6_i32 : i32 to vector<2x1xi32>
    %294 = arith.cmpi sgt, %36, %293 : vector<2x1xi32>
    %295 = vector.shape_cast %294 : vector<2x1xi1> to vector<2x1xi1>
    %296 = vector.broadcast %295 : vector<2x1xi1> to vector<2x32xi1>
    %297 = arith.select %296, %292, %260 : vector<2x32xi1>, vector<2x32xf32>
    %c0_81 = arith.constant 0 : index
    %c0_82 = arith.constant 0 : index
    %298 = vector.load %arg9[%c0_81, %c0_82] : memref<2x32xf32, #tpu.memory_space<vmem>>, vector<2x32xf32>
    tpu.vector_store %arg9[%c0_81, %c0_82], %297 {strides = array<i32>} : memref<2x32xf32, #tpu.memory_space<vmem>>, vector<2x32xf32>,
    return
  }
  func.func @transform_0(%arg0: i32) -> (i32, i32) {
    %c0_i32 = arith.constant 0 : i32
    %c0_i32_0 = arith.constant 0 : i32
    %c0_i32_1 = arith.constant 0 : i32
    return %c0_i32, %c0_i32_0 : i32, i32
  }
  func.func @transform_1(%arg0: i32) -> (i32, i32) {
    %c0_i32 = arith.constant 0 : i32
    %c0_i32_0 = arith.constant 0 : i32
    %c0_i32_1 = arith.constant 0 : i32
    return %c0_i32, %c0_i32_0 : i32, i32
  }
  func.func @transform_2(%arg0: i32) -> (i32, i32) {
    %c0_i32 = arith.constant 0 : i32
    %c0_i32_0 = arith.constant 0 : i32
    %c0_i32_1 = arith.constant 0 : i32
    return %c0_i32, %c0_i32_0 : i32, i32
  }
  func.func @transform_3(%arg0: i32) -> (i32, i32) {
    %c0_i32 = arith.constant 0 : i32
    %c0_i32_0 = arith.constant 0 : i32
    %c0_i32_1 = arith.constant 0 : i32
    return %c0_i32, %c0_i32_0 : i32, i32
  }
  func.func @transform_4(%arg0: i32) -> (i32, i32) {
    %c0_i32 = arith.constant 0 : i32
    %c0_i32_0 = arith.constant 0 : i32
    %c0_i32_1 = arith.constant 0 : i32
    return %c0_i32, %c0_i32_0 : i32, i32
  }
  func.func @transform_5(%arg0: i32) -> (i32, i32) {
    %c0_i32 = arith.constant 0 : i32
    %c0_i32_0 = arith.constant 0 : i32
    %c0_i32_1 = arith.constant 0 : i32
    return %c0_i32, %c0_i32_0 : i32, i32
  }
  func.func @transform_6(%arg0: i32) -> (i32, i32) {
    %c0_i32 = arith.constant 0 : i32
    %c0_i32_0 = arith.constant 0 : i32
    %c0_i32_1 = arith.constant 0 : i32
    return %c0_i32, %c0_i32_0 : i32, i32
  }
  func.func @transform_7(%arg0: i32) -> (i32, i32) {
    %c0_i32 = arith.constant 0 : i32
    %c0_i32_0 = arith.constant 0 : i32
    %c0_i32_1 = arith.constant 0 : i32
    return %c0_i32, %c0_i32_0 : i32, i32
  }
  func.func @transform_8(%arg0: i32) -> (i32, i32) {
    %c0_i32 = arith.constant 0 : i32
    %c0_i32_0 = arith.constant 0 : i32
    %c0_i32_1 = arith.constant 0 : i32
    return %c0_i32, %c0_i32_0 : i32, i32
  }
}

</mosaic_0001>

<llo_original>
// kernel: tpu_custom_call.1
$region0: #{tpu_custom_call.1}
  #allocation0 [shape = 'u32[]', space=smem, size = 0x4, offset = 0x4, fixed_abs, tag = 'smem constant byte address 0x4 - core index']
  #allocation1 [shape = 'u32[144,128]{1,0:T(1,128)}', space=vmem, size = 0x12000, scoped, tag = 'internal scratch']
  %s0 = inlined_call_operand.vmem [shape: f32[16,4], index: 0, kind: input, shape index: {}]
  %s1 = inlined_call_operand.hbm [shape: f32[14,14], index: 1, kind: input, shape index: {}]
  %s2 = inlined_call_operand.vmem [shape: f32[4,16], index: 2, kind: input, shape index: {}]
  %s3 = inlined_call_operand.vmem [shape: f32[4,16], index: 3, kind: input, shape index: {}]
  %s4 = inlined_call_operand.hbm [shape: f32[4,128], index: 4, kind: input, shape index: {}]
  %s5 = inlined_call_operand.hbm [shape: f32[16,128], index: 5, kind: input, shape index: {}]
  %s6 = inlined_call_operand.vmem [shape: f32[32,128], index: 6, kind: input, shape index: {}]
  %s7 = inlined_call_operand.vmem [shape: f32[1,128], index: 7, kind: input, shape index: {}]
  %s8 = inlined_call_operand.hbm [shape: f32[2,32], index: 8, kind: output, shape index: {}]
  %s9 = sld [smem:[#allocation0]]
  $region54: #{tpu_custom_call.1} parent=0
    _
  %s11 = ssub.s32 1, %s9
  %s12 = scalar_select 0, %s11, %s9
  $region1: #{tpu_custom_call.1} parent=0
    #allocation2 [shape = 'u8[8192]{0}', space=vmem, size = 0x2000, scoped, tag = 'input window, operand 1, single buffered']
    #allocation3 [shape = 's32[1]{0}', space=sflag, size = 0x4, scoped, tag = 'scoped memory for tpu_custom_call.1']
    #allocation4 [shape = 's32[1]{0}', space=sflag, size = 0x4, scoped, tag = 'scoped memory for tpu_custom_call.1']
    #allocation5 [shape = 'u8[2048]{0}', space=vmem, size = 0x800, scoped, tag = 'input window, operand 4, single buffered']
    #allocation6 [shape = 's32[1]{0}', space=sflag, size = 0x4, scoped, tag = 'scoped memory for tpu_custom_call.1']
    #allocation7 [shape = 'u8[8192]{0}', space=vmem, size = 0x2000, scoped, tag = 'input window, operand 5, single buffered']
    #allocation8 [shape = 'u8[1024]{0}', space=vmem, size = 0x400, scoped, tag = 'output window, operand 0, single buffered']
    %13 = vsyncpa [#allocation3], 0
    %14 = vsyncpa [#allocation6], 0
    %15 = vsyncpa [#allocation4], 0
    // Predicated region
    $region2: #{tpu_custom_call.1} parent=1 // pred_check
      _
    $region3: #{tpu_custom_call.1} parent=1 // pred_check_branch
      %17 = sbr.rel (0) target = $region5
    $region4: #{tpu_custom_call.1} parent=1 // pred_region
      _
    $region5: #{tpu_custom_call.1} parent=1 // pred_fallthru
      _
    // Predicated region
    $region6: #{tpu_custom_call.1} parent=1 // pred_check
      _
    $region7: #{tpu_custom_call.1} parent=1 // pred_check_branch
      %19 = sbr.rel (0) target = $region9
    $region8: #{tpu_custom_call.1} parent=1 // pred_region
      %s21 = ssub.s32 256, 256
      %22 = vsyncadd [#allocation3], %s21
      %s23 = sshll.u32 [#allocation2], 4
      %s24 = int_to_ptr.vmem [resolvable:$true] %s23
      %29 = dma.hbm_to_vmem [thread:$0]  %s1, 256, %s24, [#allocation3], 128, 128, 8
    $region9: #{tpu_custom_call.1} parent=1 // pred_fallthru
      _
    // Predicated region
    $region10: #{tpu_custom_call.1} parent=1 // pred_check
      _
    $region11: #{tpu_custom_call.1} parent=1 // pred_check_branch
      %31 = sbr.rel (0) target = $region13
    $region12: #{tpu_custom_call.1} parent=1 // pred_region
      _
    $region13: #{tpu_custom_call.1} parent=1 // pred_fallthru
      _
    // Predicated region
    $region14: #{tpu_custom_call.1} parent=1 // pred_check
      _
    $region15: #{tpu_custom_call.1} parent=1 // pred_check_branch
      %33 = sbr.rel (0) target = $region17
    $region16: #{tpu_custom_call.1} parent=1 // pred_region
      _
    $region17: #{tpu_custom_call.1} parent=1 // pred_fallthru
      _
    // Predicated region
    $region18: #{tpu_custom_call.1} parent=1 // pred_check
      _
    $region19: #{tpu_custom_call.1} parent=1 // pred_check_branch
      %35 = sbr.rel (0) target = $region21
    $region20: #{tpu_custom_call.1} parent=1 // pred_region
      %s37 = ssub.s32 64, 64
      %38 = vsyncadd [#allocation6], %s37
      %s40 = sshll.u32 [#allocation5], 4
      %s41 = int_to_ptr.vmem [resolvable:$true] %s40
      %43 = dma.hbm_to_vmem [thread:$0]  %s4, 64, %s41, [#allocation6]
    $region21: #{tpu_custom_call.1} parent=1 // pred_fallthru
      _
    // Predicated region
    $region22: #{tpu_custom_call.1} parent=1 // pred_check
      _
    $region23: #{tpu_custom_call.1} parent=1 // pred_check_branch
      %45 = sbr.rel (0) target = $region25
    $region24: #{tpu_custom_call.1} parent=1 // pred_region
      %s47 = ssub.s32 256, 256
      %48 = vsyncadd [#allocation6], %s47
      %s49 = sshll.u32 [#allocation7], 4
      %s50 = int_to_ptr.vmem [resolvable:$true] %s49
      %55 = dma.hbm_to_vmem [thread:$0]  %s5, 256, %s50, [#allocation6], 128, 128, 8
    $region25: #{tpu_custom_call.1} parent=1 // pred_fallthru
      _
    // Predicated region
    $region26: #{tpu_custom_call.1} parent=1 // pred_check
      _
    $region27: #{tpu_custom_call.1} parent=1 // pred_check_branch
      %57 = sbr.rel (0) target = $region29
    $region28: #{tpu_custom_call.1} parent=1 // pred_region
      _
    $region29: #{tpu_custom_call.1} parent=1 // pred_fallthru
      _
    // Predicated region
    $region30: #{tpu_custom_call.1} parent=1 // pred_check
      _
    $region31: #{tpu_custom_call.1} parent=1 // pred_check_branch
      %59 = sbr.rel (0) target = $region33
    $region32: #{tpu_custom_call.1} parent=1 // pred_region
      _
    $region33: #{tpu_custom_call.1} parent=1 // pred_fallthru
      _
    // Predicated region
    $region34: #{tpu_custom_call.1} parent=1 // pred_check
      _
    $region35: #{tpu_custom_call.1} parent=1 // pred_check_branch
      %61 = sbr.rel (0) target = $region37
    $region36: #{tpu_custom_call.1} parent=1 // pred_region
      %62 = dma.done [#allocation3], 256
    $region37: #{tpu_custom_call.1} parent=1 // pred_fallthru
      _
    // Predicated region
    $region38: #{tpu_custom_call.1} parent=1 // pred_check
      _
    $region39: #{tpu_custom_call.1} parent=1 // pred_check_branch
      %64 = sbr.rel (0) target = $region41
    $region40: #{tpu_custom_call.1} parent=1 // pred_region
      %65 = dma.done [#allocation6], 64
    $region41: #{tpu_custom_call.1} parent=1 // pred_fallthru
      _
    // Predicated region
    $region42: #{tpu_custom_call.1} parent=1 // pred_check
      _
    $region43: #{tpu_custom_call.1} parent=1 // pred_check_branch
      %67 = sbr.rel (0) target = $region45
    $region44: #{tpu_custom_call.1} parent=1 // pred_region
      %68 = dma.done [#allocation6], 256
    $region45: #{tpu_custom_call.1} parent=1 // pred_fallthru
      _
    %v69 = vld [vmem:[#allocation2] sm:$0xff]
    %v70 = vld [vmem:[#allocation2 + $0x8] sm:$0x3f]
    %v71 = vld [vmem:[%s2] sm:$0xf]
    %v72 = vld [vmem:[%s3] sm:$0xf]
    %v73 = vld [vmem:[#allocation5] sm:$0xf]
    %v74 = vld [vmem:[#allocation7] sm:$0xff]
    %v75 = vld [vmem:[#allocation7 + $0x8] sm:$0xff]
    %v76 = vld [vmem:[%s6] sm:$0xff]
    %v77 = vld [vmem:[%s6 + $0x8] sm:$0xff]
    %v78 = vld [vmem:[%s6 + $0x10] sm:$0xff]
    %v79 = vld [vmem:[%s6 + $0x18] sm:$0xff]
    %v80 = vld [vmem:[%s7] sm:$0x1]
    %v81 = vld [vmem:[%s0] sm:$0xff]
    %v82 = vld [vmem:[%s0 + $0x8] sm:$0xff]
    %vm85 = vcmask 1041408
    %v86 = vrot.slane %v81, 6
    %v87 = vrot.slane %v82, 6
    %v88 = vsel %vm85, %v86, %v87
    %v91 = vsub.f32 %v81, %v86
    %v92 = vsub.f32 %v82, %v88
    %vm95 = vcmask 1045504
    %v96 = vrot.slane %v91, 2
    %v97 = vrot.slane %v92, 2
    %v98 = vsel %vm95, %v96, %v97
    %vm100 = vcmask 113664
    %v102 = vsel %vm100, %v69, 0
    %v105 = vsel %vm100, %v70, 0
    %v107 = vsel %vm95, %v97, 0
    %109 = vmatprep.subr.mxu0 0.0
    %110 = vmatpush1.msra.mxu0 %v98
    %111 = vmatprep.subr.mxu0 0.0
    %112 = vmatpush1.msra.mxu0 %v107
    %113 = vmatprep.subr.mxu0 0.0
    %114 = vmatpush1.msra.mxu0 0.0
    %115 = vmatprep.subr.mxu0 0.0
    %116 = vmatpush1.msra.mxu0 0.0
    %117 = vmatprep.subr.mxu0 0.0
    %118 = vmatpush1.msra.mxu0 0.0
    %119 = vmatprep.subr.mxu0 0.0
    %120 = vmatpush1.msra.mxu0 0.0
    %121 = vmatprep.subr.mxu0 0.0
    %122 = vmatpush1.msra.mxu0 0.0
    %123 = vmatprep.subr.mxu0 0.0
    %124 = vmatpush1.msra.mxu0 0.0
    %125 = vmatprep.subr.mxu0 0.0
    %126 = vmatpush1.msra.mxu0 0.0
    %127 = vmatprep.subr.mxu0 0.0
    %128 = vmatpush1.msra.mxu0 0.0
    %129 = vmatprep.subr.mxu0 0.0
    %130 = vmatpush1.msra.mxu0 0.0
    %131 = vmatprep.subr.mxu0 0.0
    %132 = vmatpush1.msra.mxu0 0.0
    %133 = vmatprep.subr.mxu0 0.0
    %134 = vmatpush1.msra.mxu0 0.0
    %135 = vmatprep.subr.mxu0 0.0
    %136 = vmatpush1.msra.mxu0 0.0
    %137 = vmatprep.subr.mxu0 0.0
    %138 = vmatpush1.msra.mxu0 0.0
    %139 = vmatprep.subr.mxu0 0.0
    %140 = vmatpush1.msra.mxu0 0.0
    %141 = vmatprep.subr.mxu0 0.0
    %142 = vmatpush1.msra.mxu0 0.0
    %143 = vmatprep.subr.mxu0 0.0
    %144 = vmatpush1.msra.mxu0 0.0
    %145 = vmatprep.subr.mxu0 0.0
    %146 = vmatpush1.msra.mxu0 0.0
    %147 = vmatprep.subr.mxu0 0.0
    %148 = vmatpush1.msra.mxu0 0.0
    %149 = vmatprep.subr.mxu0 0.0
    %150 = vmatpush1.msra.mxu0 0.0
    %151 = vmatprep.subr.mxu0 0.0
    %152 = vmatpush1.msra.mxu0 0.0
    %153 = vmatprep.subr.mxu0 0.0
    %154 = vmatpush1.msra.mxu0 0.0
    %155 = vmatprep.subr.mxu0 0.0
    %156 = vmatpush1.msra.mxu0 0.0
    %157 = vmatprep.subr.mxu0 0.0
    %158 = vmatpush1.msra.mxu0 0.0
    %159 = vmatprep.subr.mxu0 0.0
    %160 = vmatpush1.msra.mxu0 0.0
    %161 = vmatprep.subr.mxu0 0.0
    %162 = vmatpush1.msra.mxu0 0.0
    %163 = vmatprep.subr.mxu0 0.0
    %164 = vmatpush1.msra.mxu0 0.0
    %165 = vmatprep.subr.mxu0 0.0
    %166 = vmatpush1.msra.mxu0 0.0
    %167 = vmatprep.subr.mxu0 0.0
    %168 = vmatpush1.msra.mxu0 0.0
    %169 = vmatprep.subr.mxu0 0.0
    %170 = vmatpush1.msra.mxu0 0.0
    %171 = vmatprep.subr.mxu0 0.0
    %172 = vmatpush1.msra.mxu0 0.0
    %173 = vmatprep.mubr.f32.mxu0 0.0
    %174 = vmatmul.mubr.f32.gmra.mrb[0].mxu0 %v102
    %v175 = vpop.f32.mrb[0].mxu0
    %v176 = vadd.f32 0.0, %v175
    %v177 = vpop.f32.mrb[0].mxu0
    %178 = vmatprep.mubr.f32.mxu0 0.0
    %179 = vmatmul.mubr.f32.gmra.mrb[0].mxu0 %v105
    %v180 = vpop.f32.mrb[0].mxu0
    %v181 = vadd.f32 0.0, %v180
    %v182 = vpop.f32.mrb[0].mxu0
    %183 = vdwg.mxu0
    %vm184 = vcmask 31744
    %v186 = vsel %vm184, %v176, 0
    %v189 = vsel %vm184, %v181, 0
    %vm191 = vcmask 1043456
    %v193 = vsel %vm191, %v71, 0
    %195 = vmatprep.subr.mxu0 0.0
    %196 = vmatpush1.msra.mxu0 %v193
    %197 = vmatprep.subr.mxu0 0.0
    %198 = vmatpush1.msra.mxu0 0.0
    %199 = vmatprep.subr.mxu0 0.0
    %200 = vmatpush1.msra.mxu0 0.0
    %201 = vmatprep.subr.mxu0 0.0
    %202 = vmatpush1.msra.mxu0 0.0
    %203 = vmatprep.subr.mxu0 0.0
    %204 = vmatpush1.msra.mxu0 0.0
    %205 = vmatprep.subr.mxu0 0.0
    %206 = vmatpush1.msra.mxu0 0.0
    %207 = vmatprep.subr.mxu0 0.0
    %208 = vmatpush1.msra.mxu0 0.0
    %209 = vmatprep.subr.mxu0 0.0
    %210 = vmatpush1.msra.mxu0 0.0
    %211 = vmatprep.subr.mxu0 0.0
    %212 = vmatpush1.msra.mxu0 0.0
    %213 = vmatprep.subr.mxu0 0.0
    %214 = vmatpush1.msra.mxu0 0.0
    %215 = vmatprep.subr.mxu0 0.0
    %216 = vmatpush1.msra.mxu0 0.0
    %217 = vmatprep.subr.mxu0 0.0
    %218 = vmatpush1.msra.mxu0 0.0
    %219 = vmatprep.subr.mxu0 0.0
    %220 = vmatpush1.msra.mxu0 0.0
    %221 = vmatprep.subr.mxu0 0.0
    %222 = vmatpush1.msra.mxu0 0.0
    %223 = vmatprep.subr.mxu0 0.0
    %224 = vmatpush1.msra.mxu0 0.0
    %225 = vmatprep.subr.mxu0 0.0
    %226 = vmatpush1.msra.mxu0 0.0
    %227 = vmatprep.subr.mxu0 0.0
    %228 = vmatpush1.msra.mxu0 0.0
    %229 = vmatprep.subr.mxu0 0.0
    %230 = vmatpush1.msra.mxu0 0.0
    %231 = vmatprep.subr.mxu0 0.0
    %232 = vmatpush1.msra.mxu0 0.0
    %233 = vmatprep.subr.mxu0 0.0
    %234 = vmatpush1.msra.mxu0 0.0
    %235 = vmatprep.subr.mxu0 0.0
    %236 = vmatpush1.msra.mxu0 0.0
    %237 = vmatprep.subr.mxu0 0.0
    %238 = vmatpush1.msra.mxu0 0.0
    %239 = vmatprep.subr.mxu0 0.0
    %240 = vmatpush1.msra.mxu0 0.0
    %241 = vmatprep.subr.mxu0 0.0
    %242 = vmatpush1.msra.mxu0 0.0
    %243 = vmatprep.subr.mxu0 0.0
    %244 = vmatpush1.msra.mxu0 0.0
    %245 = vmatprep.subr.mxu0 0.0
    %246 = vmatpush1.msra.mxu0 0.0
    %247 = vmatprep.subr.mxu0 0.0
    %248 = vmatpush1.msra.mxu0 0.0
    %249 = vmatprep.subr.mxu0 0.0
    %250 = vmatpush1.msra.mxu0 0.0
    %251 = vmatprep.subr.mxu0 0.0
    %252 = vmatpush1.msra.mxu0 0.0
    %253 = vmatprep.subr.mxu0 0.0
    %254 = vmatpush1.msra.mxu0 0.0
    %255 = vmatprep.subr.mxu0 0.0
    %256 = vmatpush1.msra.mxu0 0.0
    %257 = vmatprep.subr.mxu0 0.0
    %258 = vmatpush1.msra.mxu0 0.0
    %259 = vmatprep.mubr.f32.mxu0 0.0
    %260 = vmatmul.mubr.f32.gmra.mrb[0].mxu0 %v186
    %v261 = vpop.f32.mrb[0].mxu0
    %v262 = vadd.f32 0.0, %v261
    %v263 = vpop.f32.mrb[0].mxu0
    %264 = vmatprep.mubr.f32.mxu0 0.0
    %265 = vmatmul.mubr.f32.gmra.mrb[0].mxu0 %v189
    %v266 = vpop.f32.mrb[0].mxu0
    %v267 = vadd.f32 0.0, %v266
    %v268 = vpop.f32.mrb[0].mxu0
    %269 = vdwg.mxu0
    %v270 = vsel %vm184, %v98, 0
    %v272 = vsel %vm184, %v97, 0
    %v275 = vsel %vm191, %v72, 0
    %277 = vmatprep.subr.mxu0 0.0
    %278 = vmatpush1.msra.mxu0 %v275
    %279 = vmatprep.subr.mxu0 0.0
    %280 = vmatpush1.msra.mxu0 0.0
    %281 = vmatprep.subr.mxu0 0.0
    %282 = vmatpush1.msra.mxu0 0.0
    %283 = vmatprep.subr.mxu0 0.0
    %284 = vmatpush1.msra.mxu0 0.0
    %285 = vmatprep.subr.mxu0 0.0
    %286 = vmatpush1.msra.mxu0 0.0
    %287 = vmatprep.subr.mxu0 0.0
    %288 = vmatpush1.msra.mxu0 0.0
    %289 = vmatprep.subr.mxu0 0.0
    %290 = vmatpush1.msra.mxu0 0.0
    %291 = vmatprep.subr.mxu0 0.0
    %292 = vmatpush1.msra.mxu0 0.0
    %293 = vmatprep.subr.mxu0 0.0
    %294 = vmatpush1.msra.mxu0 0.0
    %295 = vmatprep.subr.mxu0 0.0
    %296 = vmatpush1.msra.mxu0 0.0
    %297 = vmatprep.subr.mxu0 0.0
    %298 = vmatpush1.msra.mxu0 0.0
    %299 = vmatprep.subr.mxu0 0.0
    %300 = vmatpush1.msra.mxu0 0.0
    %301 = vmatprep.subr.mxu0 0.0
    %302 = vmatpush1.msra.mxu0 0.0
    %303 = vmatprep.subr.mxu0 0.0
    %304 = vmatpush1.msra.mxu0 0.0
    %305 = vmatprep.subr.mxu0 0.0
    %306 = vmatpush1.msra.mxu0 0.0
    %307 = vmatprep.subr.mxu0 0.0
    %308 = vmatpush1.msra.mxu0 0.0
    %309 = vmatprep.subr.mxu0 0.0
    %310 = vmatpush1.msra.mxu0 0.0
    %311 = vmatprep.subr.mxu0 0.0
    %312 = vmatpush1.msra.mxu0 0.0
    %313 = vmatprep.subr.mxu0 0.0
    %314 = vmatpush1.msra.mxu0 0.0
    %315 = vmatprep.subr.mxu0 0.0
    %316 = vmatpush1.msra.mxu0 0.0
    %317 = vmatprep.subr.mxu0 0.0
    %318 = vmatpush1.msra.mxu0 0.0
    %319 = vmatprep.subr.mxu0 0.0
    %320 = vmatpush1.msra.mxu0 0.0
    %321 = vmatprep.subr.mxu0 0.0
    %322 = vmatpush1.msra.mxu0 0.0
    %323 = vmatprep.subr.mxu0 0.0
    %324 = vmatpush1.msra.mxu0 0.0
    %325 = vmatprep.subr.mxu0 0.0
    %326 = vmatpush1.msra.mxu0 0.0
    %327 = vmatprep.subr.mxu0 0.0
    %328 = vmatpush1.msra.mxu0 0.0
    %329 = vmatprep.subr.mxu0 0.0
    %330 = vmatpush1.msra.mxu0 0.0
    %331 = vmatprep.subr.mxu0 0.0
    %332 = vmatpush1.msra.mxu0 0.0
    %333 = vmatprep.subr.mxu0 0.0
    %334 = vmatpush1.msra.mxu0 0.0
    %335 = vmatprep.subr.mxu0 0.0
    %336 = vmatpush1.msra.mxu0 0.0
    %337 = vmatprep.subr.mxu0 0.0
    %338 = vmatpush1.msra.mxu0 0.0
    %339 = vmatprep.subr.mxu0 0.0
    %340 = vmatpush1.msra.mxu0 0.0
    %341 = vmatprep.mubr.f32.mxu0 0.0
    %342 = vmatmul.mubr.f32.gmra.mrb[0].mxu0 %v270
    %v343 = vpop.f32.mrb[0].mxu0
    %v344 = vadd.f32 0.0, %v343
    %v345 = vpop.f32.mrb[0].mxu0
    %346 = vmatprep.mubr.f32.mxu0 0.0
    %347 = vmatmul.mubr.f32.gmra.mrb[0].mxu0 %v272
    %v348 = vpop.f32.mrb[0].mxu0
    %v349 = vadd.f32 0.0, %v348
    %v350 = vpop.f32.mrb[0].mxu0
    %351 = vdwg.mxu0
    %v352 = vmul.f32 %v262, %v344
    %v353 = vmul.f32 %v267, %v349
    %vm354 = vcmask 130048
    %v356 = vsel %vm354, %v352, 0
    %v359 = vsel %vm354, %v353, 0
    %361 = vmatprep.subr.mxu0 0.0
    %362 = vmatpush1.msra.mxu0 %v74
    %363 = vmatprep.subr.mxu0 0.0
    %364 = vmatpush1.msra.mxu0 %v75
    %365 = vmatprep.subr.mxu0 0.0
    %366 = vmatpush1.msra.mxu0 0.0
    %367 = vmatprep.subr.mxu0 0.0
    %368 = vmatpush1.msra.mxu0 0.0
    %369 = vmatprep.subr.mxu0 0.0
    %370 = vmatpush1.msra.mxu0 0.0
    %371 = vmatprep.subr.mxu0 0.0
    %372 = vmatpush1.msra.mxu0 0.0
    %373 = vmatprep.subr.mxu0 0.0
    %374 = vmatpush1.msra.mxu0 0.0
    %375 = vmatprep.subr.mxu0 0.0
    %376 = vmatpush1.msra.mxu0 0.0
    %377 = vmatprep.subr.mxu0 0.0
    %378 = vmatpush1.msra.mxu0 0.0
    %379 = vmatprep.subr.mxu0 0.0
    %380 = vmatpush1.msra.mxu0 0.0
    %381 = vmatprep.subr.mxu0 0.0
    %382 = vmatpush1.msra.mxu0 0.0
    %383 = vmatprep.subr.mxu0 0.0
    %384 = vmatpush1.msra.mxu0 0.0
    %385 = vmatprep.subr.mxu0 0.0
    %386 = vmatpush1.msra.mxu0 0.0
    %387 = vmatprep.subr.mxu0 0.0
    %388 = vmatpush1.msra.mxu0 0.0
    %389 = vmatprep.subr.mxu0 0.0
    %390 = vmatpush1.msra.mxu0 0.0
    %391 = vmatprep.subr.mxu0 0.0
    %392 = vmatpush1.msra.mxu0 0.0
    %393 = vmatprep.subr.mxu0 0.0
    %394 = vmatpush1.msra.mxu0 0.0
    %395 = vmatprep.subr.mxu0 0.0
    %396 = vmatpush1.msra.mxu0 0.0
    %397 = vmatprep.subr.mxu0 0.0
    %398 = vmatpush1.msra.mxu0 0.0
    %399 = vmatprep.subr.mxu0 0.0
    %400 = vmatpush1.msra.mxu0 0.0
    %401 = vmatprep.subr.mxu0 0.0
    %402 = vmatpush1.msra.mxu0 0.0
    %403 = vmatprep.subr.mxu0 0.0
    %404 = vmatpush1.msra.mxu0 0.0
    %405 = vmatprep.subr.mxu0 0.0
    %406 = vmatpush1.msra.mxu0 0.0
    %407 = vmatprep.subr.mxu0 0.0
    %408 = vmatpush1.msra.mxu0 0.0
    %409 = vmatprep.subr.mxu0 0.0
    %410 = vmatpush1.msra.mxu0 0.0
    %411 = vmatprep.subr.mxu0 0.0
    %412 = vmatpush1.msra.mxu0 0.0
    %413 = vmatprep.subr.mxu0 0.0
    %414 = vmatpush1.msra.mxu0 0.0
    %415 = vmatprep.subr.mxu0 0.0
    %416 = vmatpush1.msra.mxu0 0.0
    %417 = vmatprep.subr.mxu0 0.0
    %418 = vmatpush1.msra.mxu0 0.0
    %419 = vmatprep.subr.mxu0 0.0
    %420 = vmatpush1.msra.mxu0 0.0
    %421 = vmatprep.subr.mxu0 0.0
    %422 = vmatpush1.msra.mxu0 0.0
    %423 = vmatprep.subr.mxu0 0.0
    %424 = vmatpush1.msra.mxu0 0.0
    %425 = vmatprep.mubr.f32.mxu0 0.0
    %426 = vmatmul.mubr.f32.gmra.mrb[0].mxu0 %v356
    %v427 = vpop.f32.mrb[0].mxu0
    %v428 = vadd.f32 0.0, %v427
    %v429 = vpop.f32.mrb[0].mxu0
    %430 = vmatprep.mubr.f32.mxu0 0.0
    %431 = vmatmul.mubr.f32.gmra.mrb[0].mxu0 %v359
    %v432 = vpop.f32.mrb[0].mxu0
    %v433 = vadd.f32 0.0, %v432
    %v434 = vpop.f32.mrb[0].mxu0
    %435 = vdwg.mxu0
    %v437 = vsel %vm191, %v73, 0
    %439 = vmatprep.subr.mxu0 0.0
    %440 = vmatpush1.msra.mxu0 %v437
    %441 = vmatprep.subr.mxu0 0.0
    %442 = vmatpush1.msra.mxu0 0.0
    %443 = vmatprep.subr.mxu0 0.0
    %444 = vmatpush1.msra.mxu0 0.0
    %445 = vmatprep.subr.mxu0 0.0
    %446 = vmatpush1.msra.mxu0 0.0
    %447 = vmatprep.subr.mxu0 0.0
    %448 = vmatpush1.msra.mxu0 0.0
    %449 = vmatprep.subr.mxu0 0.0
    %450 = vmatpush1.msra.mxu0 0.0
    %451 = vmatprep.subr.mxu0 0.0
    %452 = vmatpush1.msra.mxu0 0.0
    %453 = vmatprep.subr.mxu0 0.0
    %454 = vmatpush1.msra.mxu0 0.0
    %455 = vmatprep.subr.mxu0 0.0
    %456 = vmatpush1.msra.mxu0 0.0
    %457 = vmatprep.subr.mxu0 0.0
    %458 = vmatpush1.msra.mxu0 0.0
    %459 = vmatprep.subr.mxu0 0.0
    %460 = vmatpush1.msra.mxu0 0.0
    %461 = vmatprep.subr.mxu0 0.0
    %462 = vmatpush1.msra.mxu0 0.0
    %463 = vmatprep.subr.mxu0 0.0
    %464 = vmatpush1.msra.mxu0 0.0
    %465 = vmatprep.subr.mxu0 0.0
    %466 = vmatpush1.msra.mxu0 0.0
    %467 = vmatprep.subr.mxu0 0.0
    %468 = vmatpush1.msra.mxu0 0.0
    %469 = vmatprep.subr.mxu0 0.0
    %470 = vmatpush1.msra.mxu0 0.0
    %471 = vmatprep.subr.mxu0 0.0
    %472 = vmatpush1.msra.mxu0 0.0
    %473 = vmatprep.subr.mxu0 0.0
    %474 = vmatpush1.msra.mxu0 0.0
    %475 = vmatprep.subr.mxu0 0.0
    %476 = vmatpush1.msra.mxu0 0.0
    %477 = vmatprep.subr.mxu0 0.0
    %478 = vmatpush1.msra.mxu0 0.0
    %479 = vmatprep.subr.mxu0 0.0
    %480 = vmatpush1.msra.mxu0 0.0
    %481 = vmatprep.subr.mxu0 0.0
    %482 = vmatpush1.msra.mxu0 0.0
    %483 = vmatprep.subr.mxu0 0.0
    %484 = vmatpush1.msra.mxu0 0.0
    %485 = vmatprep.subr.mxu0 0.0
    %486 = vmatpush1.msra.mxu0 0.0
    %487 = vmatprep.subr.mxu0 0.0
    %488 = vmatpush1.msra.mxu0 0.0
    %489 = vmatprep.subr.mxu0 0.0
    %490 = vmatpush1.msra.mxu0 0.0
    %491 = vmatprep.subr.mxu0 0.0
    %492 = vmatpush1.msra.mxu0 0.0
    %493 = vmatprep.subr.mxu0 0.0
    %494 = vmatpush1.msra.mxu0 0.0
    %495 = vmatprep.subr.mxu0 0.0
    %496 = vmatpush1.msra.mxu0 0.0
    %497 = vmatprep.subr.mxu0 0.0
    %498 = vmatpush1.msra.mxu0 0.0
    %499 = vmatprep.subr.mxu0 0.0
    %500 = vmatpush1.msra.mxu0 0.0
    %501 = vmatprep.subr.mxu0 0.0
    %502 = vmatpush1.msra.mxu0 0.0
    %503 = vmatprep.mubr.f32.mxu0 0.0
    %504 = vmatmul.mubr.f32.gmra.mrb[0].mxu0 %v270
    %v505 = vpop.f32.mrb[0].mxu0
    %v506 = vadd.f32 %v428, %v505
    %v507 = vpop.f32.mrb[0].mxu0
    %508 = vmatprep.mubr.f32.mxu0 0.0
    %509 = vmatmul.mubr.f32.gmra.mrb[0].mxu0 %v272
    %v510 = vpop.f32.mrb[0].mxu0
    %v511 = vadd.f32 %v433, %v510
    %v512 = vpop.f32.mrb[0].mxu0
    %513 = vdwg.mxu0
    %v514 = vand.u32 2147483647, %v91
    %v515 = vand.u32 2147483647, %v92
    %vm516 = vcmask 31746
    %v517 = vsel %vm516, %v514, -inf
    %518 = vmax.xlane.f32.xlu0 %v517
    %v519 = vpop.xlane.xlu0 %518
    %v520 = vsel %vm184, %v515, -inf
    %521 = vmax.xlane.f32.xlu0 %v520
    %v522 = vpop.xlane.xlu0 %521
    %vm523 = vcmp.gt.f32.partialorder %v519, 0.0
    %vm524 = vcmp.gt.f32.partialorder %v522, 0.0
    %v525 = vsel %vm523, 1, 0
    %v526 = vsel %vm524, 1, 0
    %v527 = vadd.s32 %v525, 1
    %v528 = vrot.slane %v525, 2
    %v529 = vadd.s32 %v527, %v528
    %v530 = vrot.slane %v526, 4
    %v531 = vadd.s32 %v529, %v530
    %v532 = vrot.slane %v526, 6
    %v533 = vadd.s32 %v531, %v532
    %v534 = vadd.s32 %v533, %v526
    %v535 = vrot.slane %v526, 2
    %v536 = vadd.s32 %v534, %v535
    %v538 = vlaneseq
    %v539 = vshrl.u32 %v538, 7
    %v540 = vsub.s32 0, %v539
    %v541 = vrot.slane %v80, %v540
    %v543 = vadd.f32 %v541, 0.0
    %v544 = vadd.f32 %v543, %v506
    %vm545 = vcmask 261120
    %v547 = vsel %vm545, 0.0, 0
    %549 = vmatprep.subr.mxu0 0.0
    %550 = vmatpush1.msra.mxu0 %v76
    %551 = vmatprep.subr.mxu0 0.0
    %552 = vmatpush1.msra.mxu0 %v77
    %553 = vmatprep.subr.mxu0 0.0
    %554 = vmatpush1.msra.mxu0 %v78
    %555 = vmatprep.subr.mxu0 0.0
    %556 = vmatpush1.msra.mxu0 %v79
    %557 = vmatprep.subr.mxu0 0.0
    %558 = vmatpush1.msra.mxu0 0.0
    %559 = vmatprep.subr.mxu0 0.0
    %560 = vmatpush1.msra.mxu0 0.0
    %561 = vmatprep.subr.mxu0 0.0
    %562 = vmatpush1.msra.mxu0 0.0
    %563 = vmatprep.subr.mxu0 0.0
    %564 = vmatpush1.msra.mxu0 0.0
    %565 = vmatprep.subr.mxu0 0.0
    %566 = vmatpush1.msra.mxu0 0.0
    %567 = vmatprep.subr.mxu0 0.0
    %568 = vmatpush1.msra.mxu0 0.0
    %569 = vmatprep.subr.mxu0 0.0
    %570 = vmatpush1.msra.mxu0 0.0
    %571 = vmatprep.subr.mxu0 0.0
    %572 = vmatpush1.msra.mxu0 0.0
    %573 = vmatprep.subr.mxu0 0.0
    %574 = vmatpush1.msra.mxu0 0.0
    %575 = vmatprep.subr.mxu0 0.0
    %576 = vmatpush1.msra.mxu0 0.0
    %577 = vmatprep.subr.mxu0 0.0
    %578 = vmatpush1.msra.mxu0 0.0
    %579 = vmatprep.subr.mxu0 0.0
    %580 = vmatpush1.msra.mxu0 0.0
    %581 = vmatprep.subr.mxu0 0.0
    %582 = vmatpush1.msra.mxu0 0.0
    %583 = vmatprep.subr.mxu0 0.0
    %584 = vmatpush1.msra.mxu0 0.0
    %585 = vmatprep.subr.mxu0 0.0
    %586 = vmatpush1.msra.mxu0 0.0
    %587 = vmatprep.subr.mxu0 0.0
    %588 = vmatpush1.msra.mxu0 0.0
    %589 = vmatprep.subr.mxu0 0.0
    %590 = vmatpush1.msra.mxu0 0.0
    %591 = vmatprep.subr.mxu0 0.0
    %592 = vmatpush1.msra.mxu0 0.0
    %593 = vmatprep.subr.mxu0 0.0
    %594 = vmatpush1.msra.mxu0 0.0
    %595 = vmatprep.subr.mxu0 0.0
    %596 = vmatpush1.msra.mxu0 0.0
    %597 = vmatprep.subr.mxu0 0.0
    %598 = vmatpush1.msra.mxu0 0.0
    %599 = vmatprep.subr.mxu0 0.0
    %600 = vmatpush1.msra.mxu0 0.0
    %601 = vmatprep.subr.mxu0 0.0
    %602 = vmatpush1.msra.mxu0 0.0
    %603 = vmatprep.subr.mxu0 0.0
    %604 = vmatpush1.msra.mxu0 0.0
    %605 = vmatprep.subr.mxu0 0.0
    %606 = vmatpush1.msra.mxu0 0.0
    %607 = vmatprep.subr.mxu0 0.0
    %608 = vmatpush1.msra.mxu0 0.0
    %609 = vmatprep.subr.mxu0 0.0
    %610 = vmatpush1.msra.mxu0 0.0
    %611 = vmatprep.subr.mxu0 0.0
    %612 = vmatpush1.msra.mxu0 0.0
    %613 = vmatprep.mubr.f32.mxu0 0.0
    %614 = vmatmul.mubr.f32.gmra.mrb[0].mxu0 %v547
    %v615 = vpop.f32.mrb[0].mxu0
    %v616 = vadd.f32 0.0, %v615
    %v617 = vpop.f32.mrb[0].mxu0
    %618 = vdwg.mxu0
    %v619 = vadd.f32 %v544, %v616
    %v620 = vmul.f32 %v619, 0.5
    %v621 = vtanh.pop %v620
    %v622 = vtanh.pop %v619
    %v623 = vmul.f32 %v621, 0.5
    %v624 = vadd.f32 %v623, 0.5
    %v625 = vmul.f32 %v624, 0.0
    %627 = vrot.lane.b32.xlu0 %v622, 64
    %v628 = vpop.permute.xlu0 %627
    %v630 = vmul.f32 %v624, %v628
    %632 = vrot.lane.b32.xlu0 %v630, 32
    %v633 = vpop.permute.xlu0 %632
    %v635 = vadd.f32 %v625, %v633
    %v636 = vtanh.pop %v635
    %638 = vrot.lane.b32.xlu0 %v636, 64
    %v639 = vpop.permute.xlu0 %638
    %v641 = vmul.f32 %v624, %v639
    %vm642 = vcmp.gt.s32.totalorder %v536, 0
    %v643 = vsel %vm642, 1, 0
    %644 = vset.pattern.permute.xlu0 0
    %645 = vperm.xlu0 %644, %v643
    %v646 = vpop.permute.xlu0 %645
    %vm647 = vcmp.eq.s32.totalorder %v646, 1
    %v649 = vrot.slane %v641, 4
    %650 = vrot.lane.b32.xlu0 %v649, 32
    %v651 = vpop.permute.xlu0 %650
    %v653 = vsel %vm647, %v651, 0.0
    %v655 = vrot.slane %v635, 4
    %656 = vrot.lane.b32.xlu0 %v655, 96
    %v657 = vpop.permute.xlu0 %656
    %v659 = vsel %vm647, %v657, 0.0
    %v661 = vrot.slane %v506, 2
    %v663 = vadd.f32 %v544, %v661
    %v665 = vrot.slane %v653, 4
    %v666 = vsel %vm545, %v665, 0
    %668 = vmatprep.subr.mxu0 0.0
    %669 = vmatpush1.msra.mxu0 %v76
    %670 = vmatprep.subr.mxu0 0.0
    %671 = vmatpush1.msra.mxu0 %v77
    %672 = vmatprep.subr.mxu0 0.0
    %673 = vmatpush1.msra.mxu0 %v78
    %674 = vmatprep.subr.mxu0 0.0
    %675 = vmatpush1.msra.mxu0 %v79
    %676 = vmatprep.subr.mxu0 0.0
    %677 = vmatpush1.msra.mxu0 0.0
    %678 = vmatprep.subr.mxu0 0.0
    %679 = vmatpush1.msra.mxu0 0.0
    %680 = vmatprep.subr.mxu0 0.0
    %681 = vmatpush1.msra.mxu0 0.0
    %682 = vmatprep.subr.mxu0 0.0
    %683 = vmatpush1.msra.mxu0 0.0
    %684 = vmatprep.subr.mxu0 0.0
    %685 = vmatpush1.msra.mxu0 0.0
    %686 = vmatprep.subr.mxu0 0.0
    %687 = vmatpush1.msra.mxu0 0.0
    %688 = vmatprep.subr.mxu0 0.0
    %689 = vmatpush1.msra.mxu0 0.0
    %690 = vmatprep.subr.mxu0 0.0
    %691 = vmatpush1.msra.mxu0 0.0
    %692 = vmatprep.subr.mxu0 0.0
    %693 = vmatpush1.msra.mxu0 0.0
    %694 = vmatprep.subr.mxu0 0.0
    %695 = vmatpush1.msra.mxu0 0.0
    %696 = vmatprep.subr.mxu0 0.0
    %697 = vmatpush1.msra.mxu0 0.0
    %698 = vmatprep.subr.mxu0 0.0
    %699 = vmatpush1.msra.mxu0 0.0
    %700 = vmatprep.subr.mxu0 0.0
    %701 = vmatpush1.msra.mxu0 0.0
    %702 = vmatprep.subr.mxu0 0.0
    %703 = vmatpush1.msra.mxu0 0.0
    %704 = vmatprep.subr.mxu0 0.0
    %705 = vmatpush1.msra.mxu0 0.0
    %706 = vmatprep.subr.mxu0 0.0
    %707 = vmatpush1.msra.mxu0 0.0
    %708 = vmatprep.subr.mxu0 0.0
    %709 = vmatpush1.msra.mxu0 0.0
    %710 = vmatprep.subr.mxu0 0.0
    %711 = vmatpush1.msra.mxu0 0.0
    %712 = vmatprep.subr.mxu0 0.0
    %713 = vmatpush1.msra.mxu0 0.0
    %714 = vmatprep.subr.mxu0 0.0
    %715 = vmatpush1.msra.mxu0 0.0
    %716 = vmatprep.subr.mxu0 0.0
    %717 = vmatpush1.msra.mxu0 0.0
    %718 = vmatprep.subr.mxu0 0.0
    %719 = vmatpush1.msra.mxu0 0.0
    %720 = vmatprep.subr.mxu0 0.0
    %721 = vmatpush1.msra.mxu0 0.0
    %722 = vmatprep.subr.mxu0 0.0
    %723 = vmatpush1.msra.mxu0 0.0
    %724 = vmatprep.subr.mxu0 0.0
    %725 = vmatpush1.msra.mxu0 0.0
    %726 = vmatprep.subr.mxu0 0.0
    %727 = vmatpush1.msra.mxu0 0.0
    %728 = vmatprep.subr.mxu0 0.0
    %729 = vmatpush1.msra.mxu0 0.0
    %730 = vmatprep.subr.mxu0 0.0
    %731 = vmatpush1.msra.mxu0 0.0
    %732 = vmatprep.mubr.f32.mxu0 0.0
    %733 = vmatmul.mubr.f32.gmra.mrb[0].mxu0 %v666
    %v734 = vpop.f32.mrb[0].mxu0
    %v735 = vadd.f32 0.0, %v734
    %v736 = vpop.f32.mrb[0].mxu0
    %737 = vdwg.mxu0
    %v738 = vadd.f32 %v663, %v735
    %v739 = vmul.f32 %v738, 0.5
    %v740 = vtanh.pop %v739
    %v741 = vtanh.pop %v738
    %v742 = vmul.f32 %v740, 0.5
    %v743 = vadd.f32 %v742, 0.5
    %v745 = vrot.slane %v659, 4
    %746 = vrot.lane.b32.xlu0 %v745, 32
    %v747 = vpop.permute.xlu0 %746
    %v749 = vmul.f32 %v743, %v747
    %751 = vrot.lane.b32.xlu0 %v741, 64
    %v752 = vpop.permute.xlu0 %751
    %v754 = vmul.f32 %v743, %v752
    %756 = vrot.lane.b32.xlu0 %v754, 32
    %v757 = vpop.permute.xlu0 %756
    %v759 = vadd.f32 %v749, %v757
    %v760 = vtanh.pop %v759
    %762 = vrot.lane.b32.xlu0 %v760, 64
    %v763 = vpop.permute.xlu0 %762
    %v765 = vmul.f32 %v743, %v763
    %vm766 = vcmp.gt.s32.totalorder %v536, 1
    %v767 = vsel %vm766, 1, 0
    %768 = vset.pattern.permute.xlu0 0
    %769 = vperm.xlu0 %768, %v767
    %v770 = vpop.permute.xlu0 %769
    %vm771 = vcmp.eq.s32.totalorder %v770, 1
    %v773 = vrot.slane %v765, 4
    %774 = vrot.lane.b32.xlu0 %v773, 32
    %v775 = vpop.permute.xlu0 %774
    %v777 = vsel %vm771, %v775, %v653
    %v779 = vrot.slane %v759, 4
    %780 = vrot.lane.b32.xlu0 %v779, 96
    %v781 = vpop.permute.xlu0 %780
    %v783 = vsel %vm771, %v781, %v659
    %v784 = vrot.slane %v506, 4
    %v786 = vadd.f32 %v663, %v784
    %v788 = vrot.slane %v777, 4
    %v789 = vsel %vm545, %v788, 0
    %791 = vmatprep.subr.mxu0 0.0
    %792 = vmatpush1.msra.mxu0 %v76
    %793 = vmatprep.subr.mxu0 0.0
    %794 = vmatpush1.msra.mxu0 %v77
    %795 = vmatprep.subr.mxu0 0.0
    %796 = vmatpush1.msra.mxu0 %v78
    %797 = vmatprep.subr.mxu0 0.0
    %798 = vmatpush1.msra.mxu0 %v79
    %799 = vmatprep.subr.mxu0 0.0
    %800 = vmatpush1.msra.mxu0 0.0
    %801 = vmatprep.subr.mxu0 0.0
    %802 = vmatpush1.msra.mxu0 0.0
    %803 = vmatprep.subr.mxu0 0.0
    %804 = vmatpush1.msra.mxu0 0.0
    %805 = vmatprep.subr.mxu0 0.0
    %806 = vmatpush1.msra.mxu0 0.0
    %807 = vmatprep.subr.mxu0 0.0
    %808 = vmatpush1.msra.mxu0 0.0
    %809 = vmatprep.subr.mxu0 0.0
    %810 = vmatpush1.msra.mxu0 0.0
    %811 = vmatprep.subr.mxu0 0.0
    %812 = vmatpush1.msra.mxu0 0.0
    %813 = vmatprep.subr.mxu0 0.0
    %814 = vmatpush1.msra.mxu0 0.0
    %815 = vmatprep.subr.mxu0 0.0
    %816 = vmatpush1.msra.mxu0 0.0
    %817 = vmatprep.subr.mxu0 0.0
    %818 = vmatpush1.msra.mxu0 0.0
    %819 = vmatprep.subr.mxu0 0.0
    %820 = vmatpush1.msra.mxu0 0.0
    %821 = vmatprep.subr.mxu0 0.0
    %822 = vmatpush1.msra.mxu0 0.0
    %823 = vmatprep.subr.mxu0 0.0
    %824 = vmatpush1.msra.mxu0 0.0
    %825 = vmatprep.subr.mxu0 0.0
    %826 = vmatpush1.msra.mxu0 0.0
    %827 = vmatprep.subr.mxu0 0.0
    %828 = vmatpush1.msra.mxu0 0.0
    %829 = vmatprep.subr.mxu0 0.0
    %830 = vmatpush1.msra.mxu0 0.0
    %831 = vmatprep.subr.mxu0 0.0
    %832 = vmatpush1.msra.mxu0 0.0
    %833 = vmatprep.subr.mxu0 0.0
    %834 = vmatpush1.msra.mxu0 0.0
    %835 = vmatprep.subr.mxu0 0.0
    %836 = vmatpush1.msra.mxu0 0.0
    %837 = vmatprep.subr.mxu0 0.0
    %838 = vmatpush1.msra.mxu0 0.0
    %839 = vmatprep.subr.mxu0 0.0
    %840 = vmatpush1.msra.mxu0 0.0
    %841 = vmatprep.subr.mxu0 0.0
    %842 = vmatpush1.msra.mxu0 0.0
    %843 = vmatprep.subr.mxu0 0.0
    %844 = vmatpush1.msra.mxu0 0.0
    %845 = vmatprep.subr.mxu0 0.0
    %846 = vmatpush1.msra.mxu0 0.0
    %847 = vmatprep.subr.mxu0 0.0
    %848 = vmatpush1.msra.mxu0 0.0
    %849 = vmatprep.subr.mxu0 0.0
    %850 = vmatpush1.msra.mxu0 0.0
    %851 = vmatprep.subr.mxu0 0.0
    %852 = vmatpush1.msra.mxu0 0.0
    %853 = vmatprep.subr.mxu0 0.0
    %854 = vmatpush1.msra.mxu0 0.0
    %855 = vmatprep.mubr.f32.mxu0 0.0
    %856 = vmatmul.mubr.f32.gmra.mrb[0].mxu0 %v789
    %v857 = vpop.f32.mrb[0].mxu0
    %v858 = vadd.f32 0.0, %v857
    %v859 = vpop.f32.mrb[0].mxu0
    %860 = vdwg.mxu0
    %v861 = vadd.f32 %v786, %v858
    %v862 = vmul.f32 %v861, 0.5
    %v863 = vtanh.pop %v862
    %v864 = vtanh.pop %v861
    %v865 = vmul.f32 %v863, 0.5
    %v866 = vadd.f32 %v865, 0.5
    %v868 = vrot.slane %v783, 4
    %869 = vrot.lane.b32.xlu0 %v868, 32
    %v870 = vpop.permute.xlu0 %869
    %v872 = vmul.f32 %v866, %v870
    %874 = vrot.lane.b32.xlu0 %v864, 64
    %v875 = vpop.permute.xlu0 %874
    %v877 = vmul.f32 %v866, %v875
    %879 = vrot.lane.b32.xlu0 %v877, 32
    %v880 = vpop.permute.xlu0 %879
    %v882 = vadd.f32 %v872, %v880
    %v883 = vtanh.pop %v882
    %885 = vrot.lane.b32.xlu0 %v883, 64
    %v886 = vpop.permute.xlu0 %885
    %v888 = vmul.f32 %v866, %v886
    %vm889 = vcmp.gt.s32.totalorder %v536, 2
    %v890 = vsel %vm889, 1, 0
    %891 = vset.pattern.permute.xlu0 0
    %892 = vperm.xlu0 %891, %v890
    %v893 = vpop.permute.xlu0 %892
    %vm894 = vcmp.eq.s32.totalorder %v893, 1
    %v896 = vrot.slane %v888, 4
    %897 = vrot.lane.b32.xlu0 %v896, 32
    %v898 = vpop.permute.xlu0 %897
    %v900 = vsel %vm894, %v898, %v777
    %v902 = vrot.slane %v882, 4
    %903 = vrot.lane.b32.xlu0 %v902, 96
    %v904 = vpop.permute.xlu0 %903
    %v906 = vsel %vm894, %v904, %v783
    %v907 = vrot.slane %v506, 6
    %v909 = vadd.f32 %v786, %v907
    %v911 = vrot.slane %v900, 4
    %v912 = vsel %vm545, %v911, 0
    %914 = vmatprep.subr.mxu0 0.0
    %915 = vmatpush1.msra.mxu0 %v76
    %916 = vmatprep.subr.mxu0 0.0
    %917 = vmatpush1.msra.mxu0 %v77
    %918 = vmatprep.subr.mxu0 0.0
    %919 = vmatpush1.msra.mxu0 %v78
    %920 = vmatprep.subr.mxu0 0.0
    %921 = vmatpush1.msra.mxu0 %v79
    %922 = vmatprep.subr.mxu0 0.0
    %923 = vmatpush1.msra.mxu0 0.0
    %924 = vmatprep.subr.mxu0 0.0
    %925 = vmatpush1.msra.mxu0 0.0
    %926 = vmatprep.subr.mxu0 0.0
    %927 = vmatpush1.msra.mxu0 0.0
    %928 = vmatprep.subr.mxu0 0.0
    %929 = vmatpush1.msra.mxu0 0.0
    %930 = vmatprep.subr.mxu0 0.0
    %931 = vmatpush1.msra.mxu0 0.0
    %932 = vmatprep.subr.mxu0 0.0
    %933 = vmatpush1.msra.mxu0 0.0
    %934 = vmatprep.subr.mxu0 0.0
    %935 = vmatpush1.msra.mxu0 0.0
    %936 = vmatprep.subr.mxu0 0.0
    %937 = vmatpush1.msra.mxu0 0.0
    %938 = vmatprep.subr.mxu0 0.0
    %939 = vmatpush1.msra.mxu0 0.0
    %940 = vmatprep.subr.mxu0 0.0
    %941 = vmatpush1.msra.mxu0 0.0
    %942 = vmatprep.subr.mxu0 0.0
    %943 = vmatpush1.msra.mxu0 0.0
    %944 = vmatprep.subr.mxu0 0.0
    %945 = vmatpush1.msra.mxu0 0.0
    %946 = vmatprep.subr.mxu0 0.0
    %947 = vmatpush1.msra.mxu0 0.0
    %948 = vmatprep.subr.mxu0 0.0
    %949 = vmatpush1.msra.mxu0 0.0
    %950 = vmatprep.subr.mxu0 0.0
    %951 = vmatpush1.msra.mxu0 0.0
    %952 = vmatprep.subr.mxu0 0.0
    %953 = vmatpush1.msra.mxu0 0.0
    %954 = vmatprep.subr.mxu0 0.0
    %955 = vmatpush1.msra.mxu0 0.0
    %956 = vmatprep.subr.mxu0 0.0
    %957 = vmatpush1.msra.mxu0 0.0
    %958 = vmatprep.subr.mxu0 0.0
    %959 = vmatpush1.msra.mxu0 0.0
    %960 = vmatprep.subr.mxu0 0.0
    %961 = vmatpush1.msra.mxu0 0.0
    %962 = vmatprep.subr.mxu0 0.0
    %963 = vmatpush1.msra.mxu0 0.0
    %964 = vmatprep.subr.mxu0 0.0
    %965 = vmatpush1.msra.mxu0 0.0
    %966 = vmatprep.subr.mxu0 0.0
    %967 = vmatpush1.msra.mxu0 0.0
    %968 = vmatprep.subr.mxu0 0.0
    %969 = vmatpush1.msra.mxu0 0.0
    %970 = vmatprep.subr.mxu0 0.0
    %971 = vmatpush1.msra.mxu0 0.0
    %972 = vmatprep.subr.mxu0 0.0
    %973 = vmatpush1.msra.mxu0 0.0
    %974 = vmatprep.subr.mxu0 0.0
    %975 = vmatpush1.msra.mxu0 0.0
    %976 = vmatprep.subr.mxu0 0.0
    %977 = vmatpush1.msra.mxu0 0.0
    %978 = vmatprep.mubr.f32.mxu0 0.0
    %979 = vmatmul.mubr.f32.gmra.mrb[0].mxu0 %v912
    %v980 = vpop.f32.mrb[0].mxu0
    %v981 = vadd.f32 0.0, %v980
    %v982 = vpop.f32.mrb[0].mxu0
    %983 = vdwg.mxu0
    %v984 = vadd.f32 %v909, %v981
    %v985 = vmul.f32 %v984, 0.5
    %v986 = vtanh.pop %v985
    %v987 = vtanh.pop %v984
    %v988 = vmul.f32 %v986, 0.5
    %v989 = vadd.f32 %v988, 0.5
    %v991 = vrot.slane %v906, 4
    %992 = vrot.lane.b32.xlu0 %v991, 32
    %v993 = vpop.permute.xlu0 %992
    %v995 = vmul.f32 %v989, %v993
    %997 = vrot.lane.b32.xlu0 %v987, 64
    %v998 = vpop.permute.xlu0 %997
    %v1000 = vmul.f32 %v989, %v998
    %1002 = vrot.lane.b32.xlu0 %v1000, 32
    %v1003 = vpop.permute.xlu0 %1002
    %v1005 = vadd.f32 %v995, %v1003
    %v1006 = vtanh.pop %v1005
    %1008 = vrot.lane.b32.xlu0 %v1006, 64
    %v1009 = vpop.permute.xlu0 %1008
    %v1011 = vmul.f32 %v989, %v1009
    %vm1012 = vcmp.gt.s32.totalorder %v536, 3
    %v1013 = vsel %vm1012, 1, 0
    %1014 = vset.pattern.permute.xlu0 0
    %1015 = vperm.xlu0 %1014, %v1013
    %v1016 = vpop.permute.xlu0 %1015
    %vm1017 = vcmp.eq.s32.totalorder %v1016, 1
    %v1019 = vrot.slane %v1011, 4
    %1020 = vrot.lane.b32.xlu0 %v1019, 32
    %v1021 = vpop.permute.xlu0 %1020
    %v1023 = vsel %vm1017, %v1021, %v900
    %v1025 = vrot.slane %v1005, 4
    %1026 = vrot.lane.b32.xlu0 %v1025, 96
    %v1027 = vpop.permute.xlu0 %1026
    %v1029 = vsel %vm1017, %v1027, %v906
    %v1030 = vadd.f32 %v909, %v511
    %v1032 = vrot.slane %v1023, 4
    %v1033 = vsel %vm545, %v1032, 0
    %1035 = vmatprep.subr.mxu0 0.0
    %1036 = vmatpush1.msra.mxu0 %v76
    %1037 = vmatprep.subr.mxu0 0.0
    %1038 = vmatpush1.msra.mxu0 %v77
    %1039 = vmatprep.subr.mxu0 0.0
    %1040 = vmatpush1.msra.mxu0 %v78
    %1041 = vmatprep.subr.mxu0 0.0
    %1042 = vmatpush1.msra.mxu0 %v79
    %1043 = vmatprep.subr.mxu0 0.0
    %1044 = vmatpush1.msra.mxu0 0.0
    %1045 = vmatprep.subr.mxu0 0.0
    %1046 = vmatpush1.msra.mxu0 0.0
    %1047 = vmatprep.subr.mxu0 0.0
    %1048 = vmatpush1.msra.mxu0 0.0
    %1049 = vmatprep.subr.mxu0 0.0
    %1050 = vmatpush1.msra.mxu0 0.0
    %1051 = vmatprep.subr.mxu0 0.0
    %1052 = vmatpush1.msra.mxu0 0.0
    %1053 = vmatprep.subr.mxu0 0.0
    %1054 = vmatpush1.msra.mxu0 0.0
    %1055 = vmatprep.subr.mxu0 0.0
    %1056 = vmatpush1.msra.mxu0 0.0
    %1057 = vmatprep.subr.mxu0 0.0
    %1058 = vmatpush1.msra.mxu0 0.0
    %1059 = vmatprep.subr.mxu0 0.0
    %1060 = vmatpush1.msra.mxu0 0.0
    %1061 = vmatprep.subr.mxu0 0.0
    %1062 = vmatpush1.msra.mxu0 0.0
    %1063 = vmatprep.subr.mxu0 0.0
    %1064 = vmatpush1.msra.mxu0 0.0
    %1065 = vmatprep.subr.mxu0 0.0
    %1066 = vmatpush1.msra.mxu0 0.0
    %1067 = vmatprep.subr.mxu0 0.0
    %1068 = vmatpush1.msra.mxu0 0.0
    %1069 = vmatprep.subr.mxu0 0.0
    %1070 = vmatpush1.msra.mxu0 0.0
    %1071 = vmatprep.subr.mxu0 0.0
    %1072 = vmatpush1.msra.mxu0 0.0
    %1073 = vmatprep.subr.mxu0 0.0
    %1074 = vmatpush1.msra.mxu0 0.0
    %1075 = vmatprep.subr.mxu0 0.0
    %1076 = vmatpush1.msra.mxu0 0.0
    %1077 = vmatprep.subr.mxu0 0.0
    %1078 = vmatpush1.msra.mxu0 0.0
    %1079 = vmatprep.subr.mxu0 0.0
    %1080 = vmatpush1.msra.mxu0 0.0
    %1081 = vmatprep.subr.mxu0 0.0
    %1082 = vmatpush1.msra.mxu0 0.0
    %1083 = vmatprep.subr.mxu0 0.0
    %1084 = vmatpush1.msra.mxu0 0.0
    %1085 = vmatprep.subr.mxu0 0.0
    %1086 = vmatpush1.msra.mxu0 0.0
    %1087 = vmatprep.subr.mxu0 0.0
    %1088 = vmatpush1.msra.mxu0 0.0
    %1089 = vmatprep.subr.mxu0 0.0
    %1090 = vmatpush1.msra.mxu0 0.0
    %1091 = vmatprep.subr.mxu0 0.0
    %1092 = vmatpush1.msra.mxu0 0.0
    %1093 = vmatprep.subr.mxu0 0.0
    %1094 = vmatpush1.msra.mxu0 0.0
    %1095 = vmatprep.subr.mxu0 0.0
    %1096 = vmatpush1.msra.mxu0 0.0
    %1097 = vmatprep.subr.mxu0 0.0
    %1098 = vmatpush1.msra.mxu0 0.0
    %1099 = vmatprep.mubr.f32.mxu0 0.0
    %1100 = vmatmul.mubr.f32.gmra.mrb[0].mxu0 %v1033
    %v1101 = vpop.f32.mrb[0].mxu0
    %v1102 = vadd.f32 0.0, %v1101
    %v1103 = vpop.f32.mrb[0].mxu0
    %1104 = vdwg.mxu0
    %v1105 = vadd.f32 %v1030, %v1102
    %v1106 = vmul.f32 %v1105, 0.5
    %v1107 = vtanh.pop %v1106
    %v1108 = vtanh.pop %v1105
    %v1109 = vmul.f32 %v1107, 0.5
    %v1110 = vadd.f32 %v1109, 0.5
    %v1112 = vrot.slane %v1029, 4
    %1113 = vrot.lane.b32.xlu0 %v1112, 32
    %v1114 = vpop.permute.xlu0 %1113
    %v1116 = vmul.f32 %v1110, %v1114
    %1118 = vrot.lane.b32.xlu0 %v1108, 64
    %v1119 = vpop.permute.xlu0 %1118
    %v1121 = vmul.f32 %v1110, %v1119
    %1123 = vrot.lane.b32.xlu0 %v1121, 32
    %v1124 = vpop.permute.xlu0 %1123
    %v1126 = vadd.f32 %v1116, %v1124
    %v1127 = vtanh.pop %v1126
    %1129 = vrot.lane.b32.xlu0 %v1127, 64
    %v1130 = vpop.permute.xlu0 %1129
    %v1132 = vmul.f32 %v1110, %v1130
    %vm1133 = vcmp.gt.s32.totalorder %v536, 4
    %v1134 = vsel %vm1133, 1, 0
    %1135 = vset.pattern.permute.xlu0 0
    %1136 = vperm.xlu0 %1135, %v1134
    %v1137 = vpop.permute.xlu0 %1136
    %vm1138 = vcmp.eq.s32.totalorder %v1137, 1
    %v1140 = vrot.slane %v1132, 4
    %1141 = vrot.lane.b32.xlu0 %v1140, 32
    %v1142 = vpop.permute.xlu0 %1141
    %v1144 = vsel %vm1138, %v1142, %v1023
    %v1146 = vrot.slane %v1126, 4
    %1147 = vrot.lane.b32.xlu0 %v1146, 96
    %v1148 = vpop.permute.xlu0 %1147
    %v1150 = vsel %vm1138, %v1148, %v1029
    %v1152 = vrot.slane %v511, 2
    %v1154 = vadd.f32 %v1030, %v1152
    %v1156 = vrot.slane %v1144, 4
    %v1157 = vsel %vm545, %v1156, 0
    %1159 = vmatprep.subr.mxu0 0.0
    %1160 = vmatpush1.msra.mxu0 %v76
    %1161 = vmatprep.subr.mxu0 0.0
    %1162 = vmatpush1.msra.mxu0 %v77
    %1163 = vmatprep.subr.mxu0 0.0
    %1164 = vmatpush1.msra.mxu0 %v78
    %1165 = vmatprep.subr.mxu0 0.0
    %1166 = vmatpush1.msra.mxu0 %v79
    %1167 = vmatprep.subr.mxu0 0.0
    %1168 = vmatpush1.msra.mxu0 0.0
    %1169 = vmatprep.subr.mxu0 0.0
    %1170 = vmatpush1.msra.mxu0 0.0
    %1171 = vmatprep.subr.mxu0 0.0
    %1172 = vmatpush1.msra.mxu0 0.0
    %1173 = vmatprep.subr.mxu0 0.0
    %1174 = vmatpush1.msra.mxu0 0.0
    %1175 = vmatprep.subr.mxu0 0.0
    %1176 = vmatpush1.msra.mxu0 0.0
    %1177 = vmatprep.subr.mxu0 0.0
    %1178 = vmatpush1.msra.mxu0 0.0
    %1179 = vmatprep.subr.mxu0 0.0
    %1180 = vmatpush1.msra.mxu0 0.0
    %1181 = vmatprep.subr.mxu0 0.0
    %1182 = vmatpush1.msra.mxu0 0.0
    %1183 = vmatprep.subr.mxu0 0.0
    %1184 = vmatpush1.msra.mxu0 0.0
    %1185 = vmatprep.subr.mxu0 0.0
    %1186 = vmatpush1.msra.mxu0 0.0
    %1187 = vmatprep.subr.mxu0 0.0
    %1188 = vmatpush1.msra.mxu0 0.0
    %1189 = vmatprep.subr.mxu0 0.0
    %1190 = vmatpush1.msra.mxu0 0.0
    %1191 = vmatprep.subr.mxu0 0.0
    %1192 = vmatpush1.msra.mxu0 0.0
    %1193 = vmatprep.subr.mxu0 0.0
    %1194 = vmatpush1.msra.mxu0 0.0
    %1195 = vmatprep.subr.mxu0 0.0
    %1196 = vmatpush1.msra.mxu0 0.0
    %1197 = vmatprep.subr.mxu0 0.0
    %1198 = vmatpush1.msra.mxu0 0.0
    %1199 = vmatprep.subr.mxu0 0.0
    %1200 = vmatpush1.msra.mxu0 0.0
    %1201 = vmatprep.subr.mxu0 0.0
    %1202 = vmatpush1.msra.mxu0 0.0
    %1203 = vmatprep.subr.mxu0 0.0
    %1204 = vmatpush1.msra.mxu0 0.0
    %1205 = vmatprep.subr.mxu0 0.0
    %1206 = vmatpush1.msra.mxu0 0.0
    %1207 = vmatprep.subr.mxu0 0.0
    %1208 = vmatpush1.msra.mxu0 0.0
    %1209 = vmatprep.subr.mxu0 0.0
    %1210 = vmatpush1.msra.mxu0 0.0
    %1211 = vmatprep.subr.mxu0 0.0
    %1212 = vmatpush1.msra.mxu0 0.0
    %1213 = vmatprep.subr.mxu0 0.0
    %1214 = vmatpush1.msra.mxu0 0.0
    %1215 = vmatprep.subr.mxu0 0.0
    %1216 = vmatpush1.msra.mxu0 0.0
    %1217 = vmatprep.subr.mxu0 0.0
    %1218 = vmatpush1.msra.mxu0 0.0
    %1219 = vmatprep.subr.mxu0 0.0
    %1220 = vmatpush1.msra.mxu0 0.0
    %1221 = vmatprep.subr.mxu0 0.0
    %1222 = vmatpush1.msra.mxu0 0.0
    %1223 = vmatprep.mubr.f32.mxu0 0.0
    %1224 = vmatmul.mubr.f32.gmra.mrb[0].mxu0 %v1157
    %v1225 = vpop.f32.mrb[0].mxu0
    %v1226 = vadd.f32 0.0, %v1225
    %v1227 = vpop.f32.mrb[0].mxu0
    %1228 = vdwg.mxu0
    %v1229 = vadd.f32 %v1154, %v1226
    %v1230 = vmul.f32 %v1229, 0.5
    %v1231 = vtanh.pop %v1230
    %v1232 = vtanh.pop %v1229
    %v1233 = vmul.f32 %v1231, 0.5
    %v1234 = vadd.f32 %v1233, 0.5
    %v1236 = vrot.slane %v1150, 4
    %1237 = vrot.lane.b32.xlu0 %v1236, 32
    %v1238 = vpop.permute.xlu0 %1237
    %v1240 = vmul.f32 %v1234, %v1238
    %1242 = vrot.lane.b32.xlu0 %v1232, 64
    %v1243 = vpop.permute.xlu0 %1242
    %v1245 = vmul.f32 %v1234, %v1243
    %1247 = vrot.lane.b32.xlu0 %v1245, 32
    %v1248 = vpop.permute.xlu0 %1247
    %v1250 = vadd.f32 %v1240, %v1248
    %v1251 = vtanh.pop %v1250
    %1253 = vrot.lane.b32.xlu0 %v1251, 64
    %v1254 = vpop.permute.xlu0 %1253
    %v1256 = vmul.f32 %v1234, %v1254
    %vm1257 = vcmp.gt.s32.totalorder %v536, 5
    %v1258 = vsel %vm1257, 1, 0
    %1259 = vset.pattern.permute.xlu0 0
    %1260 = vperm.xlu0 %1259, %v1258
    %v1261 = vpop.permute.xlu0 %1260
    %vm1262 = vcmp.eq.s32.totalorder %v1261, 1
    %v1264 = vrot.slane %v1256, 4
    %1265 = vrot.lane.b32.xlu0 %v1264, 32
    %v1266 = vpop.permute.xlu0 %1265
    %v1268 = vsel %vm1262, %v1266, %v1144
    %v1270 = vrot.slane %v1250, 4
    %1271 = vrot.lane.b32.xlu0 %v1270, 96
    %v1272 = vpop.permute.xlu0 %1271
    %v1274 = vsel %vm1262, %v1272, %v1150
    %v1275 = vrot.slane %v511, 4
    %v1277 = vadd.f32 %v1154, %v1275
    %v1279 = vrot.slane %v1268, 4
    %v1280 = vsel %vm545, %v1279, 0
    %1282 = vmatprep.subr.mxu0 0.0
    %1283 = vmatpush1.msra.mxu0 %v76
    %1284 = vmatprep.subr.mxu0 0.0
    %1285 = vmatpush1.msra.mxu0 %v77
    %1286 = vmatprep.subr.mxu0 0.0
    %1287 = vmatpush1.msra.mxu0 %v78
    %1288 = vmatprep.subr.mxu0 0.0
    %1289 = vmatpush1.msra.mxu0 %v79
    %1290 = vmatprep.subr.mxu0 0.0
    %1291 = vmatpush1.msra.mxu0 0.0
    %1292 = vmatprep.subr.mxu0 0.0
    %1293 = vmatpush1.msra.mxu0 0.0
    %1294 = vmatprep.subr.mxu0 0.0
    %1295 = vmatpush1.msra.mxu0 0.0
    %1296 = vmatprep.subr.mxu0 0.0
    %1297 = vmatpush1.msra.mxu0 0.0
    %1298 = vmatprep.subr.mxu0 0.0
    %1299 = vmatpush1.msra.mxu0 0.0
    %1300 = vmatprep.subr.mxu0 0.0
    %1301 = vmatpush1.msra.mxu0 0.0
    %1302 = vmatprep.subr.mxu0 0.0
    %1303 = vmatpush1.msra.mxu0 0.0
    %1304 = vmatprep.subr.mxu0 0.0
    %1305 = vmatpush1.msra.mxu0 0.0
    %1306 = vmatprep.subr.mxu0 0.0
    %1307 = vmatpush1.msra.mxu0 0.0
    %1308 = vmatprep.subr.mxu0 0.0
    %1309 = vmatpush1.msra.mxu0 0.0
    %1310 = vmatprep.subr.mxu0 0.0
    %1311 = vmatpush1.msra.mxu0 0.0
    %1312 = vmatprep.subr.mxu0 0.0
    %1313 = vmatpush1.msra.mxu0 0.0
    %1314 = vmatprep.subr.mxu0 0.0
    %1315 = vmatpush1.msra.mxu0 0.0
    %1316 = vmatprep.subr.mxu0 0.0
    %1317 = vmatpush1.msra.mxu0 0.0
    %1318 = vmatprep.subr.mxu0 0.0
    %1319 = vmatpush1.msra.mxu0 0.0
    %1320 = vmatprep.subr.mxu0 0.0
    %1321 = vmatpush1.msra.mxu0 0.0
    %1322 = vmatprep.subr.mxu0 0.0
    %1323 = vmatpush1.msra.mxu0 0.0
    %1324 = vmatprep.subr.mxu0 0.0
    %1325 = vmatpush1.msra.mxu0 0.0
    %1326 = vmatprep.subr.mxu0 0.0
    %1327 = vmatpush1.msra.mxu0 0.0
    %1328 = vmatprep.subr.mxu0 0.0
    %1329 = vmatpush1.msra.mxu0 0.0
    %1330 = vmatprep.subr.mxu0 0.0
    %1331 = vmatpush1.msra.mxu0 0.0
    %1332 = vmatprep.subr.mxu0 0.0
    %1333 = vmatpush1.msra.mxu0 0.0
    %1334 = vmatprep.subr.mxu0 0.0
    %1335 = vmatpush1.msra.mxu0 0.0
    %1336 = vmatprep.subr.mxu0 0.0
    %1337 = vmatpush1.msra.mxu0 0.0
    %1338 = vmatprep.subr.mxu0 0.0
    %1339 = vmatpush1.msra.mxu0 0.0
    %1340 = vmatprep.subr.mxu0 0.0
    %1341 = vmatpush1.msra.mxu0 0.0
    %1342 = vmatprep.subr.mxu0 0.0
    %1343 = vmatpush1.msra.mxu0 0.0
    %1344 = vmatprep.subr.mxu0 0.0
    %1345 = vmatpush1.msra.mxu0 0.0
    %1346 = vmatprep.mubr.f32.mxu0 0.0
    %1347 = vmatmul.mubr.f32.gmra.mrb[0].mxu0 %v1280
    %v1348 = vpop.f32.mrb[0].mxu0
    %v1349 = vadd.f32 0.0, %v1348
    %v1350 = vpop.f32.mrb[0].mxu0
    %1351 = vdwg.mxu0
    %v1352 = vadd.f32 %v1277, %v1349
    %v1353 = vmul.f32 %v1352, 0.5
    %v1354 = vtanh.pop %v1353
    %v1355 = vtanh.pop %v1352
    %v1356 = vmul.f32 %v1354, 0.5
    %v1357 = vadd.f32 %v1356, 0.5
    %v1359 = vrot.slane %v1274, 4
    %1360 = vrot.lane.b32.xlu0 %v1359, 32
    %v1361 = vpop.permute.xlu0 %1360
    %v1363 = vmul.f32 %v1357, %v1361
    %1365 = vrot.lane.b32.xlu0 %v1355, 64
    %v1366 = vpop.permute.xlu0 %1365
    %v1368 = vmul.f32 %v1357, %v1366
    %1370 = vrot.lane.b32.xlu0 %v1368, 32
    %v1371 = vpop.permute.xlu0 %1370
    %v1373 = vadd.f32 %v1363, %v1371
    %v1374 = vtanh.pop %v1373
    %1376 = vrot.lane.b32.xlu0 %v1374, 64
    %v1377 = vpop.permute.xlu0 %1376
    %v1379 = vmul.f32 %v1357, %v1377
    %vm1380 = vcmp.gt.s32.totalorder %v536, 6
    %v1381 = vsel %vm1380, 1, 0
    %1382 = vset.pattern.permute.xlu0 0
    %1383 = vperm.xlu0 %1382, %v1381
    %v1384 = vpop.permute.xlu0 %1383
    %vm1385 = vcmp.eq.s32.totalorder %v1384, 1
    %v1387 = vrot.slane %v1379, 4
    %1388 = vrot.lane.b32.xlu0 %v1387, 32
    %v1389 = vpop.permute.xlu0 %1388
    %v1391 = vsel %vm1385, %v1389, %v1268
    %vm1392 = vcmask 259076
    %1393 = vst.msk [vmem:[#allocation8 - $0x4] sm:$0x30] %vm1392, %v1391
    // Predicated region
    $region46: #{tpu_custom_call.1} parent=1 // pred_check
      _
    $region47: #{tpu_custom_call.1} parent=1 // pred_check_branch
      %1395 = sbr.rel (0) target = $region49
    $region48: #{tpu_custom_call.1} parent=1 // pred_region
      %s1397 = ssub.s32 32, 32
      %1398 = vsyncadd [#allocation4], %s1397
      %s1400 = sshll.u32 [#allocation8], 4
      %s1401 = int_to_ptr.vmem [resolvable:$true] %s1400
      %1403 = dma.vmem_to_hbm [thread:$0]  %s1401, 32, %s8, [#allocation4]
    $region49: #{tpu_custom_call.1} parent=1 // pred_fallthru
      _
    // Predicated region
    $region50: #{tpu_custom_call.1} parent=1 // pred_check
      _
    $region51: #{tpu_custom_call.1} parent=1 // pred_check_branch
      %1405 = sbr.rel (0) target = $region53
    $region52: #{tpu_custom_call.1} parent=1 // pred_region
      %1406 = dma.done [#allocation4], 32
    $region53: #{tpu_custom_call.1} parent=1 // pred_fallthru
      _
    %1407 = vsyncpa [#allocation3], 1
    %1408 = vsyncpa [#allocation6], 1
    %1409 = vsyncpa [#allocation4], 1

</llo_original>
